<compile_context>
chip_gen: v6e
topology: v6e:2x2x1
jax: 0.10.0
libtpu: 0.0.40
codegen_flags: <defaults>
</compile_context>

<pallas_src>
import functools

import numpy as np
import jax
import jax.numpy as jnp
from jax.experimental import pallas as pl
from jax.experimental.pallas import tpu as pltpu


def _round_up(x, m):
    return ((x + m - 1) // m) * m


def _fused_embed_kernel(pool_ref, occ_ref, wp_ref, wo_ref, b_ref, o_ref, *,
                        compute_dtype, precision):
    # Two MXU dots whose output columns are disjoint halves of one lane-dense
    # 128-wide tile; bias add on the VPU; single unmasked 128-lane store.
    a_pool = pool_ref[...].astype(compute_dtype)
    a_occ = occ_ref[...].astype(compute_dtype)
    acc = jnp.dot(a_pool, wp_ref[...],
                  preferred_element_type=jnp.float32, precision=precision)
    acc = acc + jnp.dot(a_occ, wo_ref[...],
                        preferred_element_type=jnp.float32, precision=precision)
    o_ref[...] = (acc + b_ref[...]).astype(o_ref.dtype)


def fused_embed_all(pool2d, occ2d, wp_pad, wo_pad, b_pad, *,
                    tm=1024, compute_dtype=jnp.float32, precision=None):
    """pool2d: (M, D_pool), occ2d: (M, D_occ) -> (M, n_out) f32 where columns
    [0, H) hold the pool embedding and [H, 2H) the occupancy embedding."""
    m, d_pool = pool2d.shape
    d_occ = occ2d.shape[1]
    n_out = wp_pad.shape[1]

    # Row tile: big enough to amortize the ~0.35 us/grid-step overhead and hit
    # the HBM roofline; capped at 2048 so double-buffered tiles stay well
    # inside v5e's 16 MiB default scoped-VMEM.
    tm = max(8, min(int(tm), 2048))
    tm = min(tm, _round_up(m, 8))
    # Keep >= 2 row tiles whenever there is enough work so the "parallel"
    # grid axis lets v7x shard across its 2 TensorCores.
    if m > 16 and pl.cdiv(m, tm) < 2:
        tm = max(8, _round_up(pl.cdiv(m, 2), 8))
    grid_m = pl.cdiv(m, tm)     # ragged last block is masked by Pallas

    itemsize = lambda dt: jnp.dtype(dt).itemsize
    vmem_est = (2 * tm * (d_pool + d_occ) * itemsize(pool2d.dtype)   # dbl-buffered inputs
                + 2 * tm * n_out * 4                                 # dbl-buffered output
                + (d_pool + d_occ + 1) * n_out * itemsize(wp_pad.dtype))
    vmem_limit = int(min(max(2 * vmem_est + (1 << 20), 16 << 20), 48 << 20))

    kernel = functools.partial(_fused_embed_kernel,
                               compute_dtype=compute_dtype, precision=precision)
    return pl.pallas_call(
        kernel,
        grid=(grid_m,),
        in_specs=[
            pl.BlockSpec((tm, d_pool), lambda i: (i, 0)),     # streamed activations
            pl.BlockSpec((tm, d_occ), lambda i: (i, 0)),      # streamed activations
            pl.BlockSpec((d_pool, n_out), lambda i: (0, 0)),  # VMEM-resident weight
            pl.BlockSpec((d_occ, n_out), lambda i: (0, 0)),   # VMEM-resident weight
            pl.BlockSpec((1, n_out), lambda i: (0, 0)),       # VMEM-resident bias
        ],
        out_specs=pl.BlockSpec((tm, n_out), lambda i: (i, 0)),
        out_shape=jax.ShapeDtypeStruct((m, n_out), jnp.float32),
        compiler_params=pltpu.CompilerParams(
            dimension_semantics=("parallel",),
            vmem_limit_bytes=vmem_limit),
    )(pool2d, occ2d, wp_pad, wo_pad, b_pad)


class SimulatedInteractionModule:
    """JAX/Pallas port of the torch SimulatedInteractionModule."""

    def __init__(self, obs, pred, seq_start_end, pool_data, occ_data,
                 w_pool, b_pool, w_occ, b_occ, *, use_bf16=False, tm=1024):
        self.pool_data, self.occ_data = pool_data, occ_data
        # Book-keeping indices stay on the host (numpy) -> no device sync per call.
        self.start_end = np.asarray(seq_start_end)
        self.traj_len = obs.shape[0] - 1 + pred.shape[0]
        self.num_seqs = self.start_end.shape[0]
        self.t, self.s = 0, 0
        self.w_pool, self.b_pool = w_pool, b_pool
        self.w_occ, self.b_occ = w_occ, b_occ
        self.hidden = w_pool.shape[1]
        self.d_pool = int(np.prod(pool_data.shape[2:]))
        self.d_occ = int(np.prod(occ_data.shape[2:]))
        self.use_bf16 = use_bf16
        self.tm = tm
        self._emb_pool = None          # lazily precomputed (T, P, H)
        self._emb_occ = None           # lazily precomputed (T, P, H)

    # ---- one-time fused embedding of ALL rows of pool_data / occ_data ------
    def _precompute_embeddings(self):
        t_total, num_peds = self.pool_data.shape[:2]
        m = t_total * num_peds
        h = self.hidden
        n_out = _round_up(2 * h, 128)          # lane-dense output width

        # Free views: (T, P, *shape, C) -> (T*P, D); no gather / concat / pad.
        pool2d = self.pool_data.reshape(m, self.d_pool)
        occ2d = self.occ_data.reshape(m, self.d_occ)

        cdt = jnp.bfloat16 if self.use_bf16 else jnp.float32
        prec = None if self.use_bf16 else jax.lax.Precision.HIGHEST

        # Weights padded to the lane-dense output width: pool -> cols [0, H),
        # occ -> cols [H, 2H).  The zero columns are free in this HBM-bound regime.
        wp_pad = jnp.zeros((self.d_pool, n_out), cdt).at[:, :h].set(
            self.w_pool.astype(cdt))
        wo_pad = jnp.zeros((self.d_occ, n_out), cdt).at[:, h:2 * h].set(
            self.w_occ.astype(cdt))
        b_pad = (jnp.zeros((1, n_out), jnp.float32)
                 .at[0, :h].set(self.b_pool.astype(jnp.float32))
                 .at[0, h:2 * h].set(self.b_occ.astype(jnp.float32)))

        out = fused_embed_all(pool2d, occ2d, wp_pad, wo_pad, b_pad,
                              tm=self.tm, compute_dtype=cdt, precision=prec)
        # Split ONCE into two contiguous (T, P, H) arrays so every forward()
        # is a plain row slice (no per-call sub-128-lane slicing).
        self._emb_pool = out[:, :h].reshape(t_total, num_peds, h)
        self._emb_occ = out[:, h:2 * h].reshape(t_total, num_peds, h)

    # ---- forward ------------------------------------------------------------
    def forward(self, h, positions, past_positions=None, embed=True):
        t, s = self.t, self.s
        if t >= self.pool_data.shape[0]:
            raise IndexError(
                "SimulatedInteractionModule.forward called more times than "
                "there are pre-computed pooling steps")
        start = int(self.start_end[s, 0])
        end = int(self.start_end[s, 1])
        # Book-keeping identical to the torch module.
        self.s += 1
        if self.s >= self.num_seqs:
            self.t += 1
            self.s = 0

        if embed:
            if self._emb_pool is None:
                self._precompute_embeddings()
            return self._emb_pool[t, start:end], self._emb_occ[t, start:end]

        return self.pool_data[t, start:end], self.occ_data[t, start:end]


if __name__ == "__main__":
    key = jax.random.PRNGKey(0)
    ks = jax.random.split(key, 8)

    # Small shapes consistent with the module.
    obs_len, pred_len = 4, 4
    total_len = obs_len + pred_len            # pool_data leading dim
    num_peds = 6
    shape_dims = (8, 8)                       # pooling grid
    hidden = 32

    obs = jax.random.normal(ks[0], (obs_len, num_peds, 2), jnp.float32)
    pred = jax.random.normal(ks[1], (pred_len, num_peds, 2), jnp.float32)
    # Two sequences with different lengths.
    seq_start_end = np.array([[0, 2], [2, 6]], dtype=np.int32)
    pool_data = jax.random.normal(
        ks[2], (total_len, num_peds) + shape_dims + (2,), jnp.float32)
    occ_data = jax.random.uniform(
        ks[3], (total_len, num_peds) + shape_dims + (1,), jnp.float32)

    d_pool = int(np.prod(shape_dims)) * 2     # 128
    d_occ = int(np.prod(shape_dims)) * 1      # 64

    # Deterministic Linear parameters (stored (in, out), i.e. torch W transposed).
    w_pool = jax.random.normal(ks[4], (d_pool, hidden), jnp.float32) * 0.05
    b_pool = jax.random.normal(ks[5], (hidden,), jnp.float32) * 0.05
    w_occ = jax.random.normal(ks[6], (d_occ, hidden), jnp.float32) * 0.05
    b_occ = jax.random.normal(ks[7], (hidden,), jnp.float32) * 0.05

    h_state = jax.random.normal(key, (num_peds, hidden), jnp.float32)
    positions = obs[-1]

    # Host float64 reference for the two Linear layers.
    pool_np = np.asarray(pool_data, np.float64).reshape(total_len, num_peds, d_pool)
    occ_np = np.asarray(occ_data, np.float64).reshape(total_len, num_peds, d_occ)
    w_pool_np, b_pool_np = np.asarray(w_pool, np.float64), np.asarray(b_pool, np.float64)
    w_occ_np, b_occ_np = np.asarray(w_occ, np.float64), np.asarray(b_occ, np.float64)

    def run_checks(module, rtol, atol):
        # Exercise (t, s) book-keeping over several calls (covers t increments
        # and both sequence lengths).
        ref_t, ref_s = 0, 0
        for _ in range(5):
            start = int(seq_start_end[ref_s, 0]); end = int(seq_start_end[ref_s, 1])
            want_pool = pool_np[ref_t, start:end] @ w_pool_np + b_pool_np
            want_occ = occ_np[ref_t, start:end] @ w_occ_np + b_occ_np
            ref_s += 1
            if ref_s >= seq_start_end.shape[0]:
                ref_t += 1
                ref_s = 0
            out_pool, out_occ = module.forward(h_state, positions, embed=True)
            out_pool = jax.block_until_ready(out_pool)
            out_occ = jax.block_until_ready(out_occ)
            np.testing.assert_allclose(np.asarray(out_pool, np.float64), want_pool,
                                       rtol=rtol, atol=atol)
            np.testing.assert_allclose(np.asarray(out_occ, np.float64), want_occ,
                                       rtol=rtol, atol=atol)

    # f32 path (precision=HIGHEST inside the kernel) -> tight tolerance.
    mod_f32 = SimulatedInteractionModule(obs, pred, seq_start_end, pool_data,
                                         occ_data, w_pool, b_pool, w_occ, b_occ,
                                         use_bf16=False)
    run_checks(mod_f32, rtol=1e-5, atol=1e-5)

    # bf16 streaming path (f32 accumulation / f32 output) -> loose tolerance.
    mod_bf16 = SimulatedInteractionModule(obs, pred, seq_start_end, pool_data,
                                          occ_data, w_pool, b_pool, w_occ, b_occ,
                                          use_bf16=True)
    run_checks(mod_bf16, rtol=3e-2, atol=3e-2)

    # embed=False path (pure slicing semantics).  After 5 embed calls on
    # mod_f32: t=2, s=1 -> sequence [2, 6) of length 4.
    raw_pool, raw_occ = mod_f32.forward(h_state, positions, embed=False)
    jax.block_until_ready(raw_pool)
    jax.block_until_ready(raw_occ)
    assert raw_pool.shape == (4,) + shape_dims + (2,)
    assert raw_occ.shape == (4,) + shape_dims + (1,)

    print("KERNEL_OK")
</pallas_src>

<mosaic_0001>
module attributes {stable_mosaic.version = 11 : i64} {
  func.func @_fused_embed_kernel(%arg0: i32, %arg1: memref<24x128xf32, #tpu.memory_space<vmem>>, %arg2: memref<24x64xf32, #tpu.memory_space<vmem>>, %arg3: memref<128x128xf32, #tpu.memory_space<vmem>>, %arg4: memref<64x128xf32, #tpu.memory_space<vmem>>, %arg5: memref<1x128xf32, #tpu.memory_space<vmem>>, %arg6: memref<24x128xf32, #tpu.memory_space<vmem>>) attributes {dimension_semantics = [#tpu.dimension_semantics<parallel>], iteration_bounds = array<i64: 2>, scalar_prefetch = 0 : i64, scratch_operands = 0 : i64, tpu.core_type = #tpu.core_type<tc>, window_params = [{transform_indices = @transform_0, window_bounds = array<i64: 24, 128>}, {transform_indices = @transform_1, window_bounds = array<i64: 24, 64>}, {pipeline_mode = #tpu.pipeline_mode<synchronous>, transform_indices = @transform_2, window_bounds = array<i64: 128, 128>}, {pipeline_mode = #tpu.pipeline_mode<synchronous>, transform_indices = @transform_3, window_bounds = array<i64: 64, 128>}, {pipeline_mode = #tpu.pipeline_mode<synchronous>, transform_indices = @transform_4, window_bounds = array<i64: 1, 128>}, {transform_indices = @transform_5, window_bounds = array<i64: 24, 128>}]} {
    %c0 = arith.constant 0 : index
    %c0_0 = arith.constant 0 : index
    %0 = vector.load %arg1[%c0, %c0_0] : memref<24x128xf32, #tpu.memory_space<vmem>>, vector<24x128xf32>
    %c0_1 = arith.constant 0 : index
    %c0_2 = arith.constant 0 : index
    %1 = vector.load %arg2[%c0_1, %c0_2] : memref<24x64xf32, #tpu.memory_space<vmem>>, vector<24x64xf32>
    %c0_3 = arith.constant 0 : index
    %c0_4 = arith.constant 0 : index
    %2 = vector.load %arg3[%c0_3, %c0_4] : memref<128x128xf32, #tpu.memory_space<vmem>>, vector<128x128xf32>
    %cst = arith.constant dense<0.000000e+00> : vector<24x128xf32>
    %3 = tpu.matmul %0, %2, %cst {dimension_numbers = #tpu.dot_dimension_numbers<[1], [0], [0], [1], [0, 0, 1, 1], [], []>, precision = #tpu.contract_precision<fp32>} : vector<24x128xf32>, vector<128x128xf32>, vector<24x128xf32> -> vector<24x128xf32>
    %c0_5 = arith.constant 0 : index
    %c0_6 = arith.constant 0 : index
    %4 = vector.load %arg4[%c0_5, %c0_6] : memref<64x128xf32, #tpu.memory_space<vmem>>, vector<64x128xf32>
    %cst_7 = arith.constant dense<0.000000e+00> : vector<24x128xf32>
    %5 = tpu.matmul %1, %4, %cst_7 {dimension_numbers = #tpu.dot_dimension_numbers<[1], [0], [0], [1], [0, 0, 1, 1], [], []>, precision = #tpu.contract_precision<fp32>} : vector<24x64xf32>, vector<64x128xf32>, vector<24x128xf32> -> vector<24x128xf32>
    %6 = arith.addf %3, %5 : vector<24x128xf32>
    %c0_8 = arith.constant 0 : index
    %c0_9 = arith.constant 0 : index
    %7 = vector.load %arg5[%c0_8, %c0_9] : memref<1x128xf32, #tpu.memory_space<vmem>>, vector<1x128xf32>
    %8 = vector.broadcast %7 : vector<1x128xf32> to vector<24x128xf32>
    %9 = arith.addf %6, %8 : vector<24x128xf32>
    %c0_10 = arith.constant 0 : index
    %c0_11 = arith.constant 0 : index
    %10 = vector.load %arg6[%c0_10, %c0_11] : memref<24x128xf32, #tpu.memory_space<vmem>>, vector<24x128xf32>
    tpu.vector_store %arg6[%c0_10, %c0_11], %9 {strides = array<i32>} : memref<24x128xf32, #tpu.memory_space<vmem>>, vector<24x128xf32>,
    return
  }
  func.func @transform_0(%arg0: i32) -> (i32, i32) {
    %c0_i32 = arith.constant 0 : i32
    %c0_i32_0 = arith.constant 0 : i32
    return %arg0, %c0_i32 : i32, i32
  }
  func.func @transform_1(%arg0: i32) -> (i32, i32) {
    %c0_i32 = arith.constant 0 : i32
    %c0_i32_0 = arith.constant 0 : i32
    return %arg0, %c0_i32 : i32, i32
  }
  func.func @transform_2(%arg0: i32) -> (i32, i32) {
    %c0_i32 = arith.constant 0 : i32
    %c0_i32_0 = arith.constant 0 : i32
    %c0_i32_1 = arith.constant 0 : i32
    return %c0_i32, %c0_i32_0 : i32, i32
  }
  func.func @transform_3(%arg0: i32) -> (i32, i32) {
    %c0_i32 = arith.constant 0 : i32
    %c0_i32_0 = arith.constant 0 : i32
    %c0_i32_1 = arith.constant 0 : i32
    return %c0_i32, %c0_i32_0 : i32, i32
  }
  func.func @transform_4(%arg0: i32) -> (i32, i32) {
    %c0_i32 = arith.constant 0 : i32
    %c0_i32_0 = arith.constant 0 : i32
    %c0_i32_1 = arith.constant 0 : i32
    return %c0_i32, %c0_i32_0 : i32, i32
  }
  func.func @transform_5(%arg0: i32) -> (i32, i32) {
    %c0_i32 = arith.constant 0 : i32
    %c0_i32_0 = arith.constant 0 : i32
    return %arg0, %c0_i32 : i32, i32
  }
}

</mosaic_0001>

<llo_original>
// kernel: tpu_custom_call.1
$region0: #{tpu_custom_call.1}
  #allocation0 [shape = 'u32[]', space=smem, size = 0x4, offset = 0x4, fixed_abs, tag = 'smem constant byte address 0x4 - core index']
  #allocation1 [shape = 'u32[144,128]{1,0:T(1,128)}', space=vmem, size = 0x12000, scoped, tag = 'internal scratch']
  %s0 = inlined_call_operand.hbm [shape: f32[48,128], index: 0, kind: input, shape index: {}]
  %s1 = inlined_call_operand.hbm [shape: f32[48,64], index: 1, kind: input, shape index: {}]
  %s2 = inlined_call_operand.hbm [shape: f32[128,128], index: 2, kind: input, shape index: {}]
  %s3 = inlined_call_operand.hbm [shape: f32[64,128], index: 3, kind: input, shape index: {}]
  %s4 = inlined_call_operand.vmem [shape: f32[1,128], index: 4, kind: input, shape index: {}]
  %s5 = inlined_call_operand.hbm [shape: f32[48,128], index: 5, kind: output, shape index: {}]
  %s6 = sld [smem:[#allocation0]]
  $region69: #{tpu_custom_call.1} parent=0
    _
  %s8 = ssub.s32 1, %s6
  %s9 = scalar_select 0, %s8, %s6
  $region1: #{tpu_custom_call.1} parent=0
    #allocation2 [shape = 'u8[24576]{0}', space=vmem, size = 0x6000, scoped, tag = 'input window, operand 0']
    #allocation3 [shape = 's32[2]{0}', space=sflag, size = 0x8, scoped, tag = 'scoped memory for tpu_custom_call.1']
    #allocation4 [shape = 's32[2]{0}', space=sflag, size = 0x8, scoped, tag = 'scoped memory for tpu_custom_call.1']
    #allocation5 [shape = 'u8[24576]{0}', space=vmem, size = 0x6000, scoped, tag = 'input window, operand 1']
    #allocation6 [shape = 's32[2]{0}', space=sflag, size = 0x8, scoped, tag = 'scoped memory for tpu_custom_call.1']
    #allocation7 [shape = 'u8[65536]{0}', space=vmem, size = 0x10000, scoped, tag = 'input window, operand 2, single buffered']
    #allocation8 [shape = 'u8[32768]{0}', space=vmem, size = 0x8000, scoped, tag = 'input window, operand 3, single buffered']
    #allocation9 [shape = 's32[1]{0}', space=sflag, size = 0x4, scoped, tag = 'scoped memory for tpu_custom_call.1']
    #allocation10 [shape = 'u8[24576]{0}', space=vmem, size = 0x6000, scoped, tag = 'output window, operand 0']
    %10 = vsyncpa [#allocation3], 0
    %s11 = scalar_lea.sflag [#allocation3], 1
    %12 = vsyncpa %s11, 0
    %13 = vsyncpa [#allocation6], 0
    %s14 = scalar_lea.sflag [#allocation6], 1
    %15 = vsyncpa %s14, 0
    %16 = vsyncpa [#allocation9], 0
    %17 = vsyncpa [#allocation4], 0
    %s18 = scalar_lea.sflag [#allocation4], 1
    %19 = vsyncpa %s18, 0
    loop: start=0, step=1, limit=4
    $region2: #{tpu_custom_call.1} parent=1 // loop_pre_header
      _
    $region3: #{tpu_custom_call.1} parent=1 // loop_header
      %s21 = sphi 0, %s25
      %p22 = scmp.ge.s32.totalorder %s21, 4
      %s31 = sphi 0, %s33
      %s34 = sphi 0, %s31
      %s35 = sphi 0, %s34
      %s51 = sphi 0, %s35
      %s57 = sphi 0, %s59
      %s60 = sphi 0, %s57
      %s61 = sphi 0, %s60
      %s77 = sphi 0, %s61
      %s81 = sphi 0, %s81
      %s83 = sphi 0, %s81
      %s84 = sphi 0, %s83
      %s98 = sphi 0, %s84
      %s102 = sphi 0, %s102
      %s104 = sphi 0, %s102
      %s105 = sphi 0, %s104
      %s119 = sphi 0, %s105
      %s123 = sphi 0, %s123
      %s125 = sphi 0, %s123
      %s126 = sphi 0, %s125
      %s140 = sphi 0, %s126
      %s146 = sphi 0, %s148
      %s149 = sphi 0, %s146
      %s150 = sphi 0, %s149
      %s166 = sphi 0, %s150
    $region4: #{tpu_custom_call.1} parent=1 // loop_header_branch
      %24 = sbr.rel (%p22) target = $region8
    $region5: #{tpu_custom_call.1} parent=1 // loop_body
      %s26 = ssub.s32 %s21, 1
      %s27 = ssub.s32 %s21, 2
      %s28 = sadd.s32 %s21, 1
      %s29 = ssub.s32 %s21, %s28
      %p30 = scmp.eq.s32.totalorder %s29, 0
      %s32 = sadd.s32 %s31, 1
      %s33 = scalar_select %p30, %s31, %s32
      %p36 = pneg %p30
      %p37 = scmp.eq.s32.totalorder %s21, 1
      %p38 = por %p36, %p37
      %p39 = scmp.ne.s32.totalorder %s31, %s34
      %p40 = scmp.eq.s32.totalorder %s21, 0
      %p41 = por %p39, %p40
      %p42 = scmp.ne.s32.totalorder %s31, %s34
      %p43 = scmp.eq.s32.totalorder %s26, 1
      %p44 = por %p42, %p43
      %p45 = scmp.ne.s32.totalorder %s34, %s35
      %p46 = scmp.eq.s32.totalorder %s26, 0
      %p47 = por %p45, %p46
      %p48 = scmp.ne.s32.totalorder %s34, %s35
      %p49 = scmp.eq.s32.totalorder %s27, 1
      %p50 = por %p48, %p49
      %p52 = scmp.ne.s32.totalorder %s35, %s51
      %p53 = scmp.eq.s32.totalorder %s27, 0
      %p54 = por %p52, %p53
      %s55 = ssub.s32 %s21, %s28
      %p56 = scmp.eq.s32.totalorder %s55, 0
      %s58 = sadd.s32 %s57, 1
      %s59 = scalar_select %p56, %s57, %s58
      %p62 = pneg %p56
      %p63 = scmp.eq.s32.totalorder %s21, 1
      %p64 = por %p62, %p63
      %p65 = scmp.ne.s32.totalorder %s57, %s60
      %p66 = scmp.eq.s32.totalorder %s21, 0
      %p67 = por %p65, %p66
      %p68 = scmp.ne.s32.totalorder %s57, %s60
      %p69 = scmp.eq.s32.totalorder %s26, 1
      %p70 = por %p68, %p69
      %p71 = scmp.ne.s32.totalorder %s60, %s61
      %p72 = scmp.eq.s32.totalorder %s26, 0
      %p73 = por %p71, %p72
      %p74 = scmp.ne.s32.totalorder %s60, %s61
      %p75 = scmp.eq.s32.totalorder %s27, 1
      %p76 = por %p74, %p75
      %p78 = scmp.ne.s32.totalorder %s61, %s77
      %p79 = scmp.eq.s32.totalorder %s27, 0
      %p80 = por %p78, %p79
      %s82 = sadd.s32 %s81, 1
      %p85 = scmp.eq.s32.totalorder %s21, 1
      %p86 = scmp.ne.s32.totalorder %s81, %s83
      %p87 = scmp.eq.s32.totalorder %s21, 0
      %p88 = por %p86, %p87
      %p89 = scmp.ne.s32.totalorder %s81, %s83
      %p90 = scmp.eq.s32.totalorder %s26, 1
      %p91 = por %p89, %p90
      %p92 = scmp.ne.s32.totalorder %s83, %s84
      %p93 = scmp.eq.s32.totalorder %s26, 0
      %p94 = por %p92, %p93
      %p95 = scmp.ne.s32.totalorder %s83, %s84
      %p96 = scmp.eq.s32.totalorder %s27, 1
      %p97 = por %p95, %p96
      %p99 = scmp.ne.s32.totalorder %s84, %s98
      %p100 = scmp.eq.s32.totalorder %s27, 0
      %p101 = por %p99, %p100
      %s103 = sadd.s32 %s102, 1
      %p106 = scmp.eq.s32.totalorder %s21, 1
      %p107 = scmp.ne.s32.totalorder %s102, %s104
      %p108 = scmp.eq.s32.totalorder %s21, 0
      %p109 = por %p107, %p108
      %p110 = scmp.ne.s32.totalorder %s102, %s104
      %p111 = scmp.eq.s32.totalorder %s26, 1
      %p112 = por %p110, %p111
      %p113 = scmp.ne.s32.totalorder %s104, %s105
      %p114 = scmp.eq.s32.totalorder %s26, 0
      %p115 = por %p113, %p114
      %p116 = scmp.ne.s32.totalorder %s104, %s105
      %p117 = scmp.eq.s32.totalorder %s27, 1
      %p118 = por %p116, %p117
      %p120 = scmp.ne.s32.totalorder %s105, %s119
      %p121 = scmp.eq.s32.totalorder %s27, 0
      %p122 = por %p120, %p121
      %s124 = sadd.s32 %s123, 1
      %p127 = scmp.eq.s32.totalorder %s21, 1
      %p128 = scmp.ne.s32.totalorder %s123, %s125
      %p129 = scmp.eq.s32.totalorder %s21, 0
      %p130 = por %p128, %p129
      %p131 = scmp.ne.s32.totalorder %s123, %s125
      %p132 = scmp.eq.s32.totalorder %s26, 1
      %p133 = por %p131, %p132
      %p134 = scmp.ne.s32.totalorder %s125, %s126
      %p135 = scmp.eq.s32.totalorder %s26, 0
      %p136 = por %p134, %p135
      %p137 = scmp.ne.s32.totalorder %s125, %s126
      %p138 = scmp.eq.s32.totalorder %s27, 1
      %p139 = por %p137, %p138
      %p141 = scmp.ne.s32.totalorder %s126, %s140
      %p142 = scmp.eq.s32.totalorder %s27, 0
      %p143 = por %p141, %p142
      %s144 = ssub.s32 %s21, %s28
      %p145 = scmp.eq.s32.totalorder %s144, 0
      %s147 = sadd.s32 %s146, 1
      %s148 = scalar_select %p145, %s146, %s147
      %p151 = pneg %p145
      %p152 = scmp.eq.s32.totalorder %s21, 1
      %p153 = por %p151, %p152
      %p154 = scmp.ne.s32.totalorder %s146, %s149
      %p155 = scmp.eq.s32.totalorder %s21, 0
      %p156 = por %p154, %p155
      %p157 = scmp.ne.s32.totalorder %s146, %s149
      %p158 = scmp.eq.s32.totalorder %s26, 1
      %p159 = por %p157, %p158
      %p160 = scmp.ne.s32.totalorder %s149, %s150
      %p161 = scmp.eq.s32.totalorder %s26, 0
      %p162 = por %p160, %p161
      %p163 = scmp.ne.s32.totalorder %s149, %s150
      %p164 = scmp.eq.s32.totalorder %s27, 1
      %p165 = por %p163, %p164
      %p167 = scmp.ne.s32.totalorder %s150, %s166
      %p168 = scmp.eq.s32.totalorder %s27, 0
      %p169 = por %p167, %p168
      %p170 = scmp.le.s32.totalorder 1, %s21
      %p171 = scmp.lt.s32.totalorder %s21, 3
      %p172 = pnand %p170, %p171
      %p173 = pneg %p172
      // Predicated region
      $region9: #{tpu_custom_call.1} parent=5 // pred_check
        _
      $region10: #{tpu_custom_call.1} parent=5 // pred_check_branch
        %175 = sbr.rel (%p172) target = $region12
      $region11: #{tpu_custom_call.1} parent=5 // pred_region
        %s176 = ssub.s32 %s21, 1
        // Predicated region
        $region13: #{tpu_custom_call.1} parent=11 // pred_check
          %p177 = pneg %p94
        $region14: #{tpu_custom_call.1} parent=11 // pred_check_branch
          %179 = sbr.rel (%p177) target = $region16
        $region15: #{tpu_custom_call.1} parent=11 // pred_region
          %s181 = ssub.s32 2048, 2048
          %182 = vsyncadd [#allocation6], %s181
          %s183 = sshll.u32 [#allocation7], 4
          %s184 = int_to_ptr.vmem [resolvable:$true] %s183
          %189 = dma.hbm_to_vmem [thread:$0]  %s2, 2048, %s184, [#allocation6], 128, 128, 8
        $region16: #{tpu_custom_call.1} parent=11 // pred_fallthru
          _
        // Predicated region
        $region17: #{tpu_custom_call.1} parent=11 // pred_check
          %p190 = pneg %p115
        $region18: #{tpu_custom_call.1} parent=11 // pred_check_branch
          %192 = sbr.rel (%p190) target = $region20
        $region19: #{tpu_custom_call.1} parent=11 // pred_region
          %s194 = ssub.s32 1024, 1024
          %195 = vsyncadd [#allocation9], %s194
          %s196 = sshll.u32 [#allocation8], 4
          %s197 = int_to_ptr.vmem [resolvable:$true] %s196
          %202 = dma.hbm_to_vmem [thread:$0]  %s3, 1024, %s197, [#allocation9], 128, 128, 8
        $region20: #{tpu_custom_call.1} parent=11 // pred_fallthru
          _
        // Predicated region
        $region21: #{tpu_custom_call.1} parent=11 // pred_check
          %p203 = pneg %p136
        $region22: #{tpu_custom_call.1} parent=11 // pred_check_branch
          %205 = sbr.rel (%p203) target = $region24
        $region23: #{tpu_custom_call.1} parent=11 // pred_region
          _
        $region24: #{tpu_custom_call.1} parent=11 // pred_fallthru
          _
      $region12: #{tpu_custom_call.1} parent=5 // pred_fallthru
        _
      %p206 = scmp.lt.s32.totalorder %s21, 2
      // Predicated region
      $region25: #{tpu_custom_call.1} parent=5 // pred_check
        %p207 = pneg %p206
      $region26: #{tpu_custom_call.1} parent=5 // pred_check_branch
        %209 = sbr.rel (%p207) target = $region28
      $region27: #{tpu_custom_call.1} parent=5 // pred_region
        // Predicated region
        $region29: #{tpu_custom_call.1} parent=27 // pred_check
          %p210 = pneg %p41
        $region30: #{tpu_custom_call.1} parent=27 // pred_check_branch
          %212 = sbr.rel (%p210) target = $region32
        $region31: #{tpu_custom_call.1} parent=27 // pred_region
          %s213 = sand.u32 %s31, 1
          %s214 = scalar_lea.sflag [#allocation3], %s213
          %s215 = sand.u32 %s31, 1
          %s216 = smul.addr %s215, 24
          %s217 = scalar_lea.vmem [#allocation2], %s216
          %s218 = smul.u32 3, %s21
          %s220 = ssub.s32 384, 384
          %221 = vsyncadd %s214, %s220
          %s222 = smul.addr %s218, 128
          %s223 = scalar_lea.hbm %s0, %s222
          %s224 = sshll.u32 %s217, 4
          %s225 = int_to_ptr.vmem [resolvable:$true] %s224
          %230 = dma.hbm_to_vmem [thread:$0]  %s223, 384, %s225, %s214, 128, 128, 8
        $region32: #{tpu_custom_call.1} parent=27 // pred_fallthru
          _
        // Predicated region
        $region33: #{tpu_custom_call.1} parent=27 // pred_check
          %p231 = pneg %p67
        $region34: #{tpu_custom_call.1} parent=27 // pred_check_branch
          %233 = sbr.rel (%p231) target = $region36
        $region35: #{tpu_custom_call.1} parent=27 // pred_region
          %s234 = sand.u32 %s21, 1
          %s235 = scalar_lea.sflag [#allocation6], %s234
          %s236 = sand.u32 %s57, 1
          %s237 = smul.addr %s236, 24
          %s238 = scalar_lea.vmem [#allocation5], %s237
          %s239 = smul.u32 3, %s21
          %s241 = ssub.s32 384, 384
          %242 = vsyncadd %s235, %s241
          %s243 = smul.addr %s239, 128
          %s244 = scalar_lea.hbm %s1, %s243
          %s245 = sshll.u32 %s238, 4
          %s246 = int_to_ptr.vmem [resolvable:$true] %s245
          %251 = dma.hbm_to_vmem [thread:$0]  %s244, 384, %s246, %s235, 128, 128, 8
        $region36: #{tpu_custom_call.1} parent=27 // pred_fallthru
          _
      $region28: #{tpu_custom_call.1} parent=5 // pred_fallthru
        _
      %p252 = scmp.le.s32.totalorder 1, %s21
      %p253 = scmp.lt.s32.totalorder %s21, 3
      %p254 = pnand %p252, %p253
      %p255 = pneg %p254
      // Predicated region
      $region37: #{tpu_custom_call.1} parent=5 // pred_check
        _
      $region38: #{tpu_custom_call.1} parent=5 // pred_check_branch
        %257 = sbr.rel (%p254) target = $region40
      $region39: #{tpu_custom_call.1} parent=5 // pred_region
        %s258 = ssub.s32 %s21, 1
        %s259 = sand.u32 %s34, 1
        %s260 = scalar_lea.sflag [#allocation3], %s259
        %s261 = sand.u32 %s34, 1
        %s262 = smul.addr %s261, 24
        %s263 = scalar_lea.vmem [#allocation2], %s262
        // Predicated region
        $region41: #{tpu_custom_call.1} parent=39 // pred_check
          %p264 = pneg %p47
        $region42: #{tpu_custom_call.1} parent=39 // pred_check_branch
          %266 = sbr.rel (%p264) target = $region44
        $region43: #{tpu_custom_call.1} parent=39 // pred_region
          %267 = dma.done %s260, 384
        $region44: #{tpu_custom_call.1} parent=39 // pred_fallthru
          _
        %s268 = sand.u32 %s26, 1
        %s269 = scalar_lea.sflag [#allocation6], %s268
        %s270 = sand.u32 %s60, 1
        %s271 = smul.addr %s270, 24
        %s272 = scalar_lea.vmem [#allocation5], %s271
        // Predicated region
        $region45: #{tpu_custom_call.1} parent=39 // pred_check
          %p273 = pneg %p73
        $region46: #{tpu_custom_call.1} parent=39 // pred_check_branch
          %275 = sbr.rel (%p273) target = $region48
        $region47: #{tpu_custom_call.1} parent=39 // pred_region
          %276 = dma.done %s269, 384
        $region48: #{tpu_custom_call.1} parent=39 // pred_fallthru
          _
        // Predicated region
        $region49: #{tpu_custom_call.1} parent=39 // pred_check
          %p277 = pneg %p94
        $region50: #{tpu_custom_call.1} parent=39 // pred_check_branch
          %279 = sbr.rel (%p277) target = $region52
        $region51: #{tpu_custom_call.1} parent=39 // pred_region
          %280 = dma.done [#allocation6], 2048
        $region52: #{tpu_custom_call.1} parent=39 // pred_fallthru
          _
        // Predicated region
        $region53: #{tpu_custom_call.1} parent=39 // pred_check
          %p281 = pneg %p115
        $region54: #{tpu_custom_call.1} parent=39 // pred_check_branch
          %283 = sbr.rel (%p281) target = $region56
        $region55: #{tpu_custom_call.1} parent=39 // pred_region
          %284 = dma.done [#allocation9], 1024
        $region56: #{tpu_custom_call.1} parent=39 // pred_fallthru
          _
        %s285 = sand.u32 %s34, 1
        %s286 = scalar_lea.sflag [#allocation3], %s285
        %s287 = sand.u32 %s34, 1
        %s288 = smul.addr %s287, 24
        %s289 = scalar_lea.vmem [#allocation2], %s288
        %p290 = pneg %p47
        %p291 = pneg %p44
        %s292 = sand.u32 %s26, 1
        %s293 = scalar_lea.sflag [#allocation6], %s292
        %s294 = sand.u32 %s60, 1
        %s295 = smul.addr %s294, 24
        %s296 = scalar_lea.vmem [#allocation5], %s295
        %p297 = pneg %p73
        %p298 = pneg %p70
        %p299 = pneg %p94
        %p300 = pneg %p91
        %p301 = pneg %p115
        %p302 = pneg %p112
        %p303 = pneg %p136
        %p304 = pneg %p133
        %p305 = pneg %p162
        %p306 = pneg %p159
        %s307 = sand.u32 %s149, 1
        %s308 = scalar_lea.sflag [#allocation4], %s307
        %s309 = sand.u32 %s149, 1
        %s310 = smul.addr %s309, 24
        %s311 = scalar_lea.vmem [#allocation10], %s310
        %s312 = smul.u32 3, %s26
        %s313 = smul.u32 3, %s26
        %s314 = smul.u32 3, %s26
        %v315 = vld [vmem:[%s263] sm:$0xff]
        %v316 = vld [vmem:[%s263 + $0x8] sm:$0xff]
        %v317 = vld [vmem:[%s263 + $0x10] sm:$0xff]
        %v318 = vld [vmem:[%s272] sm:$0xff]
        %v319 = vld [vmem:[%s272 + $0x8] sm:$0xff]
        %v320 = vld [vmem:[%s272 + $0x10] sm:$0xff]
        %v321 = vld [vmem:[#allocation7] sm:$0xff]
        %v322 = vld [vmem:[#allocation7 + $0x8] sm:$0xff]
        %v323 = vld [vmem:[#allocation7 + $0x10] sm:$0xff]
        %v324 = vld [vmem:[#allocation7 + $0x18] sm:$0xff]
        %v325 = vld [vmem:[#allocation7 + $0x20] sm:$0xff]
        %v326 = vld [vmem:[#allocation7 + $0x28] sm:$0xff]
        %v327 = vld [vmem:[#allocation7 + $0x30] sm:$0xff]
        %v328 = vld [vmem:[#allocation7 + $0x38] sm:$0xff]
        %v329 = vld [vmem:[#allocation7 + $0x40] sm:$0xff]
        %v330 = vld [vmem:[#allocation7 + $0x48] sm:$0xff]
        %v331 = vld [vmem:[#allocation7 + $0x50] sm:$0xff]
        %v332 = vld [vmem:[#allocation7 + $0x58] sm:$0xff]
        %v333 = vld [vmem:[#allocation7 + $0x60] sm:$0xff]
        %v334 = vld [vmem:[#allocation7 + $0x68] sm:$0xff]
        %v335 = vld [vmem:[#allocation7 + $0x70] sm:$0xff]
        %v336 = vld [vmem:[#allocation7 + $0x78] sm:$0xff]
        %v337 = vld [vmem:[#allocation8] sm:$0xff]
        %v338 = vld [vmem:[#allocation8 + $0x8] sm:$0xff]
        %v339 = vld [vmem:[#allocation8 + $0x10] sm:$0xff]
        %v340 = vld [vmem:[#allocation8 + $0x18] sm:$0xff]
        %v341 = vld [vmem:[#allocation8 + $0x20] sm:$0xff]
        %v342 = vld [vmem:[#allocation8 + $0x28] sm:$0xff]
        %v343 = vld [vmem:[#allocation8 + $0x30] sm:$0xff]
        %v344 = vld [vmem:[#allocation8 + $0x38] sm:$0xff]
        %vm345 = vcmask 523264
        %v347 = vsel %vm345, %v318, 0
        %v350 = vsel %vm345, %v319, 0
        %v353 = vsel %vm345, %v320, 0
        %355 = vmatprep.subr.mxu0 0.0
        %356 = vmatpush1.msra.mxu0 0.0
        %357 = vmatprep.subr.mxu0 0.0
        %358 = vmatpush1.msra.mxu0 0.0
        %359 = vmatprep.subr.mxu0 0.0
        %360 = vmatpush1.msra.mxu0 0.0
        %361 = vmatprep.subr.mxu0 0.0
        %362 = vmatpush1.msra.mxu0 0.0
        %363 = vmatprep.subr.mxu0 0.0
        %364 = vmatpush1.msra.mxu0 0.0
        %365 = vmatprep.subr.mxu0 0.0
        %366 = vmatpush1.msra.mxu0 0.0
        %367 = vmatprep.subr.mxu0 0.0
        %368 = vmatpush1.msra.mxu0 0.0
        %369 = vmatprep.subr.mxu0 0.0
        %370 = vmatpush1.msra.mxu0 0.0
        %371 = vmatprep.subr.mxu0 0.0
        %v372 = vand.u32 %v344, 4294901760
        %373 = vmatpush1.msra.mxu0 %v372
        %374 = vmatprep.subr.mxu0 0.0
        %v375 = vand.u32 %v343, 4294901760
        %376 = vmatpush1.msra.mxu0 %v375
        %377 = vmatprep.subr.mxu0 0.0
        %v378 = vand.u32 %v342, 4294901760
        %379 = vmatpush1.msra.mxu0 %v378
        %380 = vmatprep.subr.mxu0 0.0
        %v381 = vand.u32 %v341, 4294901760
        %382 = vmatpush1.msra.mxu0 %v381
        %383 = vmatprep.subr.mxu0 0.0
        %v384 = vand.u32 %v340, 4294901760
        %385 = vmatpush1.msra.mxu0 %v384
        %386 = vmatprep.subr.mxu0 0.0
        %v387 = vand.u32 %v339, 4294901760
        %388 = vmatpush1.msra.mxu0 %v387
        %389 = vmatprep.subr.mxu0 0.0
        %v390 = vand.u32 %v338, 4294901760
        %391 = vmatpush1.msra.mxu0 %v390
        %392 = vmatprep.subr.mxu0 0.0
        %v393 = vand.u32 %v337, 4294901760
        %394 = vmatpush1.msra.mxu0 %v393
        %395 = vmatprep.subr.mxu0 0.0
        %396 = vmatpush2.msra.mxu0 0.0
        %397 = vmatprep.subr.mxu0 0.0
        %398 = vmatpush2.msra.mxu0 0.0
        %399 = vmatprep.subr.mxu0 0.0
        %400 = vmatpush2.msra.mxu0 0.0
        %401 = vmatprep.subr.mxu0 0.0
        %402 = vmatpush2.msra.mxu0 0.0
        %403 = vmatprep.subr.mxu0 0.0
        %404 = vmatpush2.msra.mxu0 0.0
        %405 = vmatprep.subr.mxu0 0.0
        %406 = vmatpush2.msra.mxu0 0.0
        %407 = vmatprep.subr.mxu0 0.0
        %408 = vmatpush2.msra.mxu0 0.0
        %409 = vmatprep.subr.mxu0 0.0
        %410 = vmatpush2.msra.mxu0 0.0
        %411 = vmatprep.subr.mxu0 0.0
        %412 = vmatpush2.msra.mxu0 0.0
        %413 = vmatprep.subr.mxu0 0.0
        %414 = vmatpush2.msra.mxu0 0.0
        %415 = vmatprep.subr.mxu0 0.0
        %416 = vmatpush2.msra.mxu0 0.0
        %417 = vmatprep.subr.mxu0 0.0
        %418 = vmatpush2.msra.mxu0 0.0
        %419 = vmatprep.subr.mxu0 0.0
        %420 = vmatpush2.msra.mxu0 0.0
        %421 = vmatprep.subr.mxu0 0.0
        %422 = vmatpush2.msra.mxu0 0.0
        %423 = vmatprep.subr.mxu0 0.0
        %424 = vmatpush2.msra.mxu0 0.0
        %425 = vmatprep.subr.mxu0 0.0
        %426 = vmatpush2.msra.mxu0 0.0
        %427 = vmatprep.mubr.f32.mxu0 0.0
        %v428 = vand.u32 %v347, 4294901760
        %v429 = vsub.f32 %v347, %v428
        %v430 = vand.u32 %v429, 4294901760
        %v431 = vsub.f32 %v429, %v430
        %v432 = vand.u32 %v431, 4294901760
        %433 = vmatmul.mubr.f32.gmra.mxu0 %v432
        %v434 = vpop.f32.mrf.mxu0
        %v435 = vadd.f32 0.0, %v434
        %v436 = vpop.f32.mrf.mxu0
        %437 = vmatprep.mubr.f32.mxu0 0.0
        %v438 = vand.u32 %v350, 4294901760
        %v439 = vsub.f32 %v350, %v438
        %v440 = vand.u32 %v439, 4294901760
        %v441 = vsub.f32 %v439, %v440
        %v442 = vand.u32 %v441, 4294901760
        %443 = vmatmul.mubr.f32.gmra.mxu0 %v442
        %v444 = vpop.f32.mrf.mxu0
        %v445 = vadd.f32 0.0, %v444
        %v446 = vpop.f32.mrf.mxu0
        %447 = vmatprep.mubr.f32.mxu0 0.0
        %v448 = vand.u32 %v353, 4294901760
        %v449 = vsub.f32 %v353, %v448
        %v450 = vand.u32 %v449, 4294901760
        %v451 = vsub.f32 %v449, %v450
        %v452 = vand.u32 %v451, 4294901760
        %453 = vmatmul.mubr.f32.gmra.mxu0 %v452
        %v454 = vpop.f32.mrf.mxu0
        %v455 = vadd.f32 0.0, %v454
        %v456 = vpop.f32.mrf.mxu0
        %457 = vdwg.mxu0
        %458 = vmatprep.subr.mxu0 0.0
        %459 = vmatpush1.msra.mxu0 0.0
        %460 = vmatprep.subr.mxu0 0.0
        %461 = vmatpush1.msra.mxu0 0.0
        %462 = vmatprep.subr.mxu0 0.0
        %463 = vmatpush1.msra.mxu0 0.0
        %464 = vmatprep.subr.mxu0 0.0
        %465 = vmatpush1.msra.mxu0 0.0
        %466 = vmatprep.subr.mxu0 0.0
        %467 = vmatpush1.msra.mxu0 0.0
        %468 = vmatprep.subr.mxu0 0.0
        %469 = vmatpush1.msra.mxu0 0.0
        %470 = vmatprep.subr.mxu0 0.0
        %471 = vmatpush1.msra.mxu0 0.0
        %472 = vmatprep.subr.mxu0 0.0
        %473 = vmatpush1.msra.mxu0 0.0
        %474 = vmatprep.subr.mxu0 0.0
        %v475 = vand.u32 %v344, 4294901760
        %v476 = vsub.f32 %v344, %v475
        %v477 = vand.u32 %v476, 4294901760
        %v478 = vsub.f32 %v476, %v477
        %v479 = vand.u32 %v478, 4294901760
        %480 = vmatpush1.msra.mxu0 %v479
        %481 = vmatprep.subr.mxu0 0.0
        %v482 = vand.u32 %v343, 4294901760
        %v483 = vsub.f32 %v343, %v482
        %v484 = vand.u32 %v483, 4294901760
        %v485 = vsub.f32 %v483, %v484
        %v486 = vand.u32 %v485, 4294901760
        %487 = vmatpush1.msra.mxu0 %v486
        %488 = vmatprep.subr.mxu0 0.0
        %v489 = vand.u32 %v342, 4294901760
        %v490 = vsub.f32 %v342, %v489
        %v491 = vand.u32 %v490, 4294901760
        %v492 = vsub.f32 %v490, %v491
        %v493 = vand.u32 %v492, 4294901760
        %494 = vmatpush1.msra.mxu0 %v493
        %495 = vmatprep.subr.mxu0 0.0
        %v496 = vand.u32 %v341, 4294901760
        %v497 = vsub.f32 %v341, %v496
        %v498 = vand.u32 %v497, 4294901760
        %v499 = vsub.f32 %v497, %v498
        %v500 = vand.u32 %v499, 4294901760
        %501 = vmatpush1.msra.mxu0 %v500
        %502 = vmatprep.subr.mxu0 0.0
        %v503 = vand.u32 %v340, 4294901760
        %v504 = vsub.f32 %v340, %v503
        %v505 = vand.u32 %v504, 4294901760
        %v506 = vsub.f32 %v504, %v505
        %v507 = vand.u32 %v506, 4294901760
        %508 = vmatpush1.msra.mxu0 %v507
        %509 = vmatprep.subr.mxu0 0.0
        %v510 = vand.u32 %v339, 4294901760
        %v511 = vsub.f32 %v339, %v510
        %v512 = vand.u32 %v511, 4294901760
        %v513 = vsub.f32 %v511, %v512
        %v514 = vand.u32 %v513, 4294901760
        %515 = vmatpush1.msra.mxu0 %v514
        %516 = vmatprep.subr.mxu0 0.0
        %v517 = vand.u32 %v338, 4294901760
        %v518 = vsub.f32 %v338, %v517
        %v519 = vand.u32 %v518, 4294901760
        %v520 = vsub.f32 %v518, %v519
        %v521 = vand.u32 %v520, 4294901760
        %522 = vmatpush1.msra.mxu0 %v521
        %523 = vmatprep.subr.mxu0 0.0
        %v524 = vand.u32 %v337, 4294901760
        %v525 = vsub.f32 %v337, %v524
        %v526 = vand.u32 %v525, 4294901760
        %v527 = vsub.f32 %v525, %v526
        %v528 = vand.u32 %v527, 4294901760
        %529 = vmatpush1.msra.mxu0 %v528
        %530 = vmatprep.subr.mxu0 0.0
        %531 = vmatpush2.msra.mxu0 0.0
        %532 = vmatprep.subr.mxu0 0.0
        %533 = vmatpush2.msra.mxu0 0.0
        %534 = vmatprep.subr.mxu0 0.0
        %535 = vmatpush2.msra.mxu0 0.0
        %536 = vmatprep.subr.mxu0 0.0
        %537 = vmatpush2.msra.mxu0 0.0
        %538 = vmatprep.subr.mxu0 0.0
        %539 = vmatpush2.msra.mxu0 0.0
        %540 = vmatprep.subr.mxu0 0.0
        %541 = vmatpush2.msra.mxu0 0.0
        %542 = vmatprep.subr.mxu0 0.0
        %543 = vmatpush2.msra.mxu0 0.0
        %544 = vmatprep.subr.mxu0 0.0
        %545 = vmatpush2.msra.mxu0 0.0
        %546 = vmatprep.subr.mxu0 0.0
        %547 = vmatpush2.msra.mxu0 0.0
        %548 = vmatprep.subr.mxu0 0.0
        %549 = vmatpush2.msra.mxu0 0.0
        %550 = vmatprep.subr.mxu0 0.0
        %551 = vmatpush2.msra.mxu0 0.0
        %552 = vmatprep.subr.mxu0 0.0
        %553 = vmatpush2.msra.mxu0 0.0
        %554 = vmatprep.subr.mxu0 0.0
        %555 = vmatpush2.msra.mxu0 0.0
        %556 = vmatprep.subr.mxu0 0.0
        %557 = vmatpush2.msra.mxu0 0.0
        %558 = vmatprep.subr.mxu0 0.0
        %559 = vmatpush2.msra.mxu0 0.0
        %560 = vmatprep.subr.mxu0 0.0
        %561 = vmatpush2.msra.mxu0 0.0
        %562 = vmatprep.mubr.f32.mxu0 0.0
        %v563 = vand.u32 %v347, 4294901760
        %564 = vmatmul.mubr.f32.gmra.mxu0 %v563
        %v565 = vpop.f32.mrf.mxu0
        %v566 = vadd.f32 %v435, %v565
        %v567 = vpop.f32.mrf.mxu0
        %568 = vmatprep.mubr.f32.mxu0 0.0
        %v569 = vand.u32 %v350, 4294901760
        %570 = vmatmul.mubr.f32.gmra.mxu0 %v569
        %v571 = vpop.f32.mrf.mxu0
        %v572 = vadd.f32 %v445, %v571
        %v573 = vpop.f32.mrf.mxu0
        %574 = vmatprep.mubr.f32.mxu0 0.0
        %v575 = vand.u32 %v353, 4294901760
        %576 = vmatmul.mubr.f32.gmra.mxu0 %v575
        %v577 = vpop.f32.mrf.mxu0
        %v578 = vadd.f32 %v455, %v577
        %v579 = vpop.f32.mrf.mxu0
        %580 = vdwg.mxu0
        %581 = vmatprep.subr.mxu0 0.0
        %582 = vmatpush1.msra.mxu0 0.0
        %583 = vmatprep.subr.mxu0 0.0
        %584 = vmatpush1.msra.mxu0 0.0
        %585 = vmatprep.subr.mxu0 0.0
        %586 = vmatpush1.msra.mxu0 0.0
        %587 = vmatprep.subr.mxu0 0.0
        %588 = vmatpush1.msra.mxu0 0.0
        %589 = vmatprep.subr.mxu0 0.0
        %590 = vmatpush1.msra.mxu0 0.0
        %591 = vmatprep.subr.mxu0 0.0
        %592 = vmatpush1.msra.mxu0 0.0
        %593 = vmatprep.subr.mxu0 0.0
        %594 = vmatpush1.msra.mxu0 0.0
        %595 = vmatprep.subr.mxu0 0.0
        %596 = vmatpush1.msra.mxu0 0.0
        %597 = vmatprep.subr.mxu0 0.0
        %v598 = vand.u32 %v344, 4294901760
        %v599 = vsub.f32 %v344, %v598
        %600 = vmatpush1.msra.mxu0 %v599
        %601 = vmatprep.subr.mxu0 0.0
        %v602 = vand.u32 %v343, 4294901760
        %v603 = vsub.f32 %v343, %v602
        %604 = vmatpush1.msra.mxu0 %v603
        %605 = vmatprep.subr.mxu0 0.0
        %v606 = vand.u32 %v342, 4294901760
        %v607 = vsub.f32 %v342, %v606
        %608 = vmatpush1.msra.mxu0 %v607
        %609 = vmatprep.subr.mxu0 0.0
        %v610 = vand.u32 %v341, 4294901760
        %v611 = vsub.f32 %v341, %v610
        %612 = vmatpush1.msra.mxu0 %v611
        %613 = vmatprep.subr.mxu0 0.0
        %v614 = vand.u32 %v340, 4294901760
        %v615 = vsub.f32 %v340, %v614
        %616 = vmatpush1.msra.mxu0 %v615
        %617 = vmatprep.subr.mxu0 0.0
        %v618 = vand.u32 %v339, 4294901760
        %v619 = vsub.f32 %v339, %v618
        %620 = vmatpush1.msra.mxu0 %v619
        %621 = vmatprep.subr.mxu0 0.0
        %v622 = vand.u32 %v338, 4294901760
        %v623 = vsub.f32 %v338, %v622
        %624 = vmatpush1.msra.mxu0 %v623
        %625 = vmatprep.subr.mxu0 0.0
        %v626 = vand.u32 %v337, 4294901760
        %v627 = vsub.f32 %v337, %v626
        %628 = vmatpush1.msra.mxu0 %v627
        %629 = vmatprep.subr.mxu0 0.0
        %630 = vmatpush2.msra.mxu0 0.0
        %631 = vmatprep.subr.mxu0 0.0
        %632 = vmatpush2.msra.mxu0 0.0
        %633 = vmatprep.subr.mxu0 0.0
        %634 = vmatpush2.msra.mxu0 0.0
        %635 = vmatprep.subr.mxu0 0.0
        %636 = vmatpush2.msra.mxu0 0.0
        %637 = vmatprep.subr.mxu0 0.0
        %638 = vmatpush2.msra.mxu0 0.0
        %639 = vmatprep.subr.mxu0 0.0
        %640 = vmatpush2.msra.mxu0 0.0
        %641 = vmatprep.subr.mxu0 0.0
        %642 = vmatpush2.msra.mxu0 0.0
        %643 = vmatprep.subr.mxu0 0.0
        %644 = vmatpush2.msra.mxu0 0.0
        %645 = vmatprep.subr.mxu0 0.0
        %646 = vmatpush2.msra.mxu0 0.0
        %647 = vmatprep.subr.mxu0 0.0
        %648 = vmatpush2.msra.mxu0 0.0
        %649 = vmatprep.subr.mxu0 0.0
        %650 = vmatpush2.msra.mxu0 0.0
        %651 = vmatprep.subr.mxu0 0.0
        %652 = vmatpush2.msra.mxu0 0.0
        %653 = vmatprep.subr.mxu0 0.0
        %654 = vmatpush2.msra.mxu0 0.0
        %655 = vmatprep.subr.mxu0 0.0
        %656 = vmatpush2.msra.mxu0 0.0
        %657 = vmatprep.subr.mxu0 0.0
        %658 = vmatpush2.msra.mxu0 0.0
        %659 = vmatprep.subr.mxu0 0.0
        %660 = vmatpush2.msra.mxu0 0.0
        %661 = vmatprep.mubr.f32.mxu0 0.0
        %v662 = vand.u32 %v347, 4294901760
        %v663 = vsub.f32 %v347, %v662
        %664 = vmatmul.mubr.f32.gmra.mxu0 %v663
        %v665 = vpop.f32.mrf.mxu0
        %v666 = vadd.f32 %v566, %v665
        %v667 = vpop.f32.mrf.mxu0
        %668 = vmatprep.mubr.f32.mxu0 0.0
        %v669 = vand.u32 %v350, 4294901760
        %v670 = vsub.f32 %v350, %v669
        %671 = vmatmul.mubr.f32.gmra.mxu0 %v670
        %v672 = vpop.f32.mrf.mxu0
        %v673 = vadd.f32 %v572, %v672
        %v674 = vpop.f32.mrf.mxu0
        %675 = vmatprep.mubr.f32.mxu0 0.0
        %v676 = vand.u32 %v353, 4294901760
        %v677 = vsub.f32 %v353, %v676
        %678 = vmatmul.mubr.f32.gmra.mxu0 %v677
        %v679 = vpop.f32.mrf.mxu0
        %v680 = vadd.f32 %v578, %v679
        %v681 = vpop.f32.mrf.mxu0
        %682 = vdwg.mxu0
        %683 = vmatprep.subr.mxu0 0.0
        %684 = vmatpush1.msra.mxu0 0.0
        %685 = vmatprep.subr.mxu0 0.0
        %686 = vmatpush1.msra.mxu0 0.0
        %687 = vmatprep.subr.mxu0 0.0
        %688 = vmatpush1.msra.mxu0 0.0
        %689 = vmatprep.subr.mxu0 0.0
        %690 = vmatpush1.msra.mxu0 0.0
        %691 = vmatprep.subr.mxu0 0.0
        %692 = vmatpush1.msra.mxu0 0.0
        %693 = vmatprep.subr.mxu0 0.0
        %694 = vmatpush1.msra.mxu0 0.0
        %695 = vmatprep.subr.mxu0 0.0
        %696 = vmatpush1.msra.mxu0 0.0
        %697 = vmatprep.subr.mxu0 0.0
        %698 = vmatpush1.msra.mxu0 0.0
        %699 = vmatprep.subr.mxu0 0.0
        %v700 = vand.u32 %v344, 4294901760
        %701 = vmatpush1.msra.mxu0 %v700
        %702 = vmatprep.subr.mxu0 0.0
        %v703 = vand.u32 %v343, 4294901760
        %704 = vmatpush1.msra.mxu0 %v703
        %705 = vmatprep.subr.mxu0 0.0
        %v706 = vand.u32 %v342, 4294901760
        %707 = vmatpush1.msra.mxu0 %v706
        %708 = vmatprep.subr.mxu0 0.0
        %v709 = vand.u32 %v341, 4294901760
        %710 = vmatpush1.msra.mxu0 %v709
        %711 = vmatprep.subr.mxu0 0.0
        %v712 = vand.u32 %v340, 4294901760
        %713 = vmatpush1.msra.mxu0 %v712
        %714 = vmatprep.subr.mxu0 0.0
        %v715 = vand.u32 %v339, 4294901760
        %716 = vmatpush1.msra.mxu0 %v715
        %717 = vmatprep.subr.mxu0 0.0
        %v718 = vand.u32 %v338, 4294901760
        %719 = vmatpush1.msra.mxu0 %v718
        %720 = vmatprep.subr.mxu0 0.0
        %v721 = vand.u32 %v337, 4294901760
        %722 = vmatpush1.msra.mxu0 %v721
        %723 = vmatprep.subr.mxu0 0.0
        %724 = vmatpush2.msra.mxu0 0.0
        %725 = vmatprep.subr.mxu0 0.0
        %726 = vmatpush2.msra.mxu0 0.0
        %727 = vmatprep.subr.mxu0 0.0
        %728 = vmatpush2.msra.mxu0 0.0
        %729 = vmatprep.subr.mxu0 0.0
        %730 = vmatpush2.msra.mxu0 0.0
        %731 = vmatprep.subr.mxu0 0.0
        %732 = vmatpush2.msra.mxu0 0.0
        %733 = vmatprep.subr.mxu0 0.0
        %734 = vmatpush2.msra.mxu0 0.0
        %735 = vmatprep.subr.mxu0 0.0
        %736 = vmatpush2.msra.mxu0 0.0
        %737 = vmatprep.subr.mxu0 0.0
        %738 = vmatpush2.msra.mxu0 0.0
        %739 = vmatprep.subr.mxu0 0.0
        %740 = vmatpush2.msra.mxu0 0.0
        %741 = vmatprep.subr.mxu0 0.0
        %742 = vmatpush2.msra.mxu0 0.0
        %743 = vmatprep.subr.mxu0 0.0
        %744 = vmatpush2.msra.mxu0 0.0
        %745 = vmatprep.subr.mxu0 0.0
        %746 = vmatpush2.msra.mxu0 0.0
        %747 = vmatprep.subr.mxu0 0.0
        %748 = vmatpush2.msra.mxu0 0.0
        %749 = vmatprep.subr.mxu0 0.0
        %750 = vmatpush2.msra.mxu0 0.0
        %751 = vmatprep.subr.mxu0 0.0
        %752 = vmatpush2.msra.mxu0 0.0
        %753 = vmatprep.subr.mxu0 0.0
        %754 = vmatpush2.msra.mxu0 0.0
        %755 = vmatprep.mubr.f32.mxu0 0.0
        %v756 = vand.u32 %v347, 4294901760
        %v757 = vsub.f32 %v347, %v756
        %v758 = vand.u32 %v757, 4294901760
        %759 = vmatmul.mubr.f32.gmra.mxu0 %v758
        %v760 = vpop.f32.mrf.mxu0
        %v761 = vadd.f32 %v666, %v760
        %v762 = vpop.f32.mrf.mxu0
        %763 = vmatprep.mubr.f32.mxu0 0.0
        %v764 = vand.u32 %v350, 4294901760
        %v765 = vsub.f32 %v350, %v764
        %v766 = vand.u32 %v765, 4294901760
        %767 = vmatmul.mubr.f32.gmra.mxu0 %v766
        %v768 = vpop.f32.mrf.mxu0
        %v769 = vadd.f32 %v673, %v768
        %v770 = vpop.f32.mrf.mxu0
        %771 = vmatprep.mubr.f32.mxu0 0.0
        %v772 = vand.u32 %v353, 4294901760
        %v773 = vsub.f32 %v353, %v772
        %v774 = vand.u32 %v773, 4294901760
        %775 = vmatmul.mubr.f32.gmra.mxu0 %v774
        %v776 = vpop.f32.mrf.mxu0
        %v777 = vadd.f32 %v680, %v776
        %v778 = vpop.f32.mrf.mxu0
        %779 = vdwg.mxu0
        %780 = vmatprep.subr.mxu0 0.0
        %781 = vmatpush1.msra.mxu0 0.0
        %782 = vmatprep.subr.mxu0 0.0
        %783 = vmatpush1.msra.mxu0 0.0
        %784 = vmatprep.subr.mxu0 0.0
        %785 = vmatpush1.msra.mxu0 0.0
        %786 = vmatprep.subr.mxu0 0.0
        %787 = vmatpush1.msra.mxu0 0.0
        %788 = vmatprep.subr.mxu0 0.0
        %789 = vmatpush1.msra.mxu0 0.0
        %790 = vmatprep.subr.mxu0 0.0
        %791 = vmatpush1.msra.mxu0 0.0
        %792 = vmatprep.subr.mxu0 0.0
        %793 = vmatpush1.msra.mxu0 0.0
        %794 = vmatprep.subr.mxu0 0.0
        %795 = vmatpush1.msra.mxu0 0.0
        %796 = vmatprep.subr.mxu0 0.0
        %v797 = vand.u32 %v344, 4294901760
        %v798 = vsub.f32 %v344, %v797
        %v799 = vand.u32 %v798, 4294901760
        %800 = vmatpush1.msra.mxu0 %v799
        %801 = vmatprep.subr.mxu0 0.0
        %v802 = vand.u32 %v343, 4294901760
        %v803 = vsub.f32 %v343, %v802
        %v804 = vand.u32 %v803, 4294901760
        %805 = vmatpush1.msra.mxu0 %v804
        %806 = vmatprep.subr.mxu0 0.0
        %v807 = vand.u32 %v342, 4294901760
        %v808 = vsub.f32 %v342, %v807
        %v809 = vand.u32 %v808, 4294901760
        %810 = vmatpush1.msra.mxu0 %v809
        %811 = vmatprep.subr.mxu0 0.0
        %v812 = vand.u32 %v341, 4294901760
        %v813 = vsub.f32 %v341, %v812
        %v814 = vand.u32 %v813, 4294901760
        %815 = vmatpush1.msra.mxu0 %v814
        %816 = vmatprep.subr.mxu0 0.0
        %v817 = vand.u32 %v340, 4294901760
        %v818 = vsub.f32 %v340, %v817
        %v819 = vand.u32 %v818, 4294901760
        %820 = vmatpush1.msra.mxu0 %v819
        %821 = vmatprep.subr.mxu0 0.0
        %v822 = vand.u32 %v339, 4294901760
        %v823 = vsub.f32 %v339, %v822
        %v824 = vand.u32 %v823, 4294901760
        %825 = vmatpush1.msra.mxu0 %v824
        %826 = vmatprep.subr.mxu0 0.0
        %v827 = vand.u32 %v338, 4294901760
        %v828 = vsub.f32 %v338, %v827
        %v829 = vand.u32 %v828, 4294901760
        %830 = vmatpush1.msra.mxu0 %v829
        %831 = vmatprep.subr.mxu0 0.0
        %v832 = vand.u32 %v337, 4294901760
        %v833 = vsub.f32 %v337, %v832
        %v834 = vand.u32 %v833, 4294901760
        %835 = vmatpush1.msra.mxu0 %v834
        %836 = vmatprep.subr.mxu0 0.0
        %837 = vmatpush2.msra.mxu0 0.0
        %838 = vmatprep.subr.mxu0 0.0
        %839 = vmatpush2.msra.mxu0 0.0
        %840 = vmatprep.subr.mxu0 0.0
        %841 = vmatpush2.msra.mxu0 0.0
        %842 = vmatprep.subr.mxu0 0.0
        %843 = vmatpush2.msra.mxu0 0.0
        %844 = vmatprep.subr.mxu0 0.0
        %845 = vmatpush2.msra.mxu0 0.0
        %846 = vmatprep.subr.mxu0 0.0
        %847 = vmatpush2.msra.mxu0 0.0
        %848 = vmatprep.subr.mxu0 0.0
        %849 = vmatpush2.msra.mxu0 0.0
        %850 = vmatprep.subr.mxu0 0.0
        %851 = vmatpush2.msra.mxu0 0.0
        %852 = vmatprep.subr.mxu0 0.0
        %853 = vmatpush2.msra.mxu0 0.0
        %854 = vmatprep.subr.mxu0 0.0
        %855 = vmatpush2.msra.mxu0 0.0
        %856 = vmatprep.subr.mxu0 0.0
        %857 = vmatpush2.msra.mxu0 0.0
        %858 = vmatprep.subr.mxu0 0.0
        %859 = vmatpush2.msra.mxu0 0.0
        %860 = vmatprep.subr.mxu0 0.0
        %861 = vmatpush2.msra.mxu0 0.0
        %862 = vmatprep.subr.mxu0 0.0
        %863 = vmatpush2.msra.mxu0 0.0
        %864 = vmatprep.subr.mxu0 0.0
        %865 = vmatpush2.msra.mxu0 0.0
        %866 = vmatprep.subr.mxu0 0.0
        %867 = vmatpush2.msra.mxu0 0.0
        %868 = vmatprep.mubr.f32.mxu0 0.0
        %v869 = vand.u32 %v347, 4294901760
        %870 = vmatmul.mubr.f32.gmra.mxu0 %v869
        %v871 = vpop.f32.mrf.mxu0
        %v872 = vadd.f32 %v761, %v871
        %v873 = vpop.f32.mrf.mxu0
        %874 = vmatprep.mubr.f32.mxu0 0.0
        %v875 = vand.u32 %v350, 4294901760
        %876 = vmatmul.mubr.f32.gmra.mxu0 %v875
        %v877 = vpop.f32.mrf.mxu0
        %v878 = vadd.f32 %v769, %v877
        %v879 = vpop.f32.mrf.mxu0
        %880 = vmatprep.mubr.f32.mxu0 0.0
        %v881 = vand.u32 %v353, 4294901760
        %882 = vmatmul.mubr.f32.gmra.mxu0 %v881
        %v883 = vpop.f32.mrf.mxu0
        %v884 = vadd.f32 %v777, %v883
        %v885 = vpop.f32.mrf.mxu0
        %886 = vdwg.mxu0
        %887 = vmatprep.subr.mxu0 0.0
        %888 = vmatpush1.msra.mxu0 0.0
        %889 = vmatprep.subr.mxu0 0.0
        %890 = vmatpush1.msra.mxu0 0.0
        %891 = vmatprep.subr.mxu0 0.0
        %892 = vmatpush1.msra.mxu0 0.0
        %893 = vmatprep.subr.mxu0 0.0
        %894 = vmatpush1.msra.mxu0 0.0
        %895 = vmatprep.subr.mxu0 0.0
        %896 = vmatpush1.msra.mxu0 0.0
        %897 = vmatprep.subr.mxu0 0.0
        %898 = vmatpush1.msra.mxu0 0.0
        %899 = vmatprep.subr.mxu0 0.0
        %900 = vmatpush1.msra.mxu0 0.0
        %901 = vmatprep.subr.mxu0 0.0
        %902 = vmatpush1.msra.mxu0 0.0
        %903 = vmatprep.subr.mxu0 0.0
        %v904 = vand.u32 %v344, 4294901760
        %905 = vmatpush1.msra.mxu0 %v904
        %906 = vmatprep.subr.mxu0 0.0
        %v907 = vand.u32 %v343, 4294901760
        %908 = vmatpush1.msra.mxu0 %v907
        %909 = vmatprep.subr.mxu0 0.0
        %v910 = vand.u32 %v342, 4294901760
        %911 = vmatpush1.msra.mxu0 %v910
        %912 = vmatprep.subr.mxu0 0.0
        %v913 = vand.u32 %v341, 4294901760
        %914 = vmatpush1.msra.mxu0 %v913
        %915 = vmatprep.subr.mxu0 0.0
        %v916 = vand.u32 %v340, 4294901760
        %917 = vmatpush1.msra.mxu0 %v916
        %918 = vmatprep.subr.mxu0 0.0
        %v919 = vand.u32 %v339, 4294901760
        %920 = vmatpush1.msra.mxu0 %v919
        %921 = vmatprep.subr.mxu0 0.0
        %v922 = vand.u32 %v338, 4294901760
        %923 = vmatpush1.msra.mxu0 %v922
        %924 = vmatprep.subr.mxu0 0.0
        %v925 = vand.u32 %v337, 4294901760
        %926 = vmatpush1.msra.mxu0 %v925
        %927 = vmatprep.subr.mxu0 0.0
        %928 = vmatpush2.msra.mxu0 0.0
        %929 = vmatprep.subr.mxu0 0.0
        %930 = vmatpush2.msra.mxu0 0.0
        %931 = vmatprep.subr.mxu0 0.0
        %932 = vmatpush2.msra.mxu0 0.0
        %933 = vmatprep.subr.mxu0 0.0
        %934 = vmatpush2.msra.mxu0 0.0
        %935 = vmatprep.subr.mxu0 0.0
        %936 = vmatpush2.msra.mxu0 0.0
        %937 = vmatprep.subr.mxu0 0.0
        %938 = vmatpush2.msra.mxu0 0.0
        %939 = vmatprep.subr.mxu0 0.0
        %940 = vmatpush2.msra.mxu0 0.0
        %941 = vmatprep.subr.mxu0 0.0
        %942 = vmatpush2.msra.mxu0 0.0
        %943 = vmatprep.subr.mxu0 0.0
        %944 = vmatpush2.msra.mxu0 0.0
        %945 = vmatprep.subr.mxu0 0.0
        %946 = vmatpush2.msra.mxu0 0.0
        %947 = vmatprep.subr.mxu0 0.0
        %948 = vmatpush2.msra.mxu0 0.0
        %949 = vmatprep.subr.mxu0 0.0
        %950 = vmatpush2.msra.mxu0 0.0
        %951 = vmatprep.subr.mxu0 0.0
        %952 = vmatpush2.msra.mxu0 0.0
        %953 = vmatprep.subr.mxu0 0.0
        %954 = vmatpush2.msra.mxu0 0.0
        %955 = vmatprep.subr.mxu0 0.0
        %956 = vmatpush2.msra.mxu0 0.0
        %957 = vmatprep.subr.mxu0 0.0
        %958 = vmatpush2.msra.mxu0 0.0
        %959 = vmatprep.mubr.f32.mxu0 0.0
        %v960 = vand.u32 %v347, 4294901760
        %961 = vmatmul.mubr.f32.gmra.mxu0 %v960
        %v962 = vpop.f32.mrf.mxu0
        %v963 = vadd.f32 %v872, %v962
        %v964 = vpop.f32.mrf.mxu0
        %965 = vmatprep.mubr.f32.mxu0 0.0
        %v966 = vand.u32 %v350, 4294901760
        %967 = vmatmul.mubr.f32.gmra.mxu0 %v966
        %v968 = vpop.f32.mrf.mxu0
        %v969 = vadd.f32 %v878, %v968
        %v970 = vpop.f32.mrf.mxu0
        %971 = vmatprep.mubr.f32.mxu0 0.0
        %v972 = vand.u32 %v353, 4294901760
        %973 = vmatmul.mubr.f32.gmra.mxu0 %v972
        %v974 = vpop.f32.mrf.mxu0
        %v975 = vadd.f32 %v884, %v974
        %v976 = vpop.f32.mrf.mxu0
        %977 = vdwg.mxu0
        %978 = vmatprep.subr.mxu0 0.0
        %v979 = vand.u32 %v336, 4294901760
        %980 = vmatpush1.msra.mxu0 %v979
        %981 = vmatprep.subr.mxu0 0.0
        %v982 = vand.u32 %v335, 4294901760
        %983 = vmatpush1.msra.mxu0 %v982
        %984 = vmatprep.subr.mxu0 0.0
        %v985 = vand.u32 %v334, 4294901760
        %986 = vmatpush1.msra.mxu0 %v985
        %987 = vmatprep.subr.mxu0 0.0
        %v988 = vand.u32 %v333, 4294901760
        %989 = vmatpush1.msra.mxu0 %v988
        %990 = vmatprep.subr.mxu0 0.0
        %v991 = vand.u32 %v332, 4294901760
        %992 = vmatpush1.msra.mxu0 %v991
        %993 = vmatprep.subr.mxu0 0.0
        %v994 = vand.u32 %v331, 4294901760
        %995 = vmatpush1.msra.mxu0 %v994
        %996 = vmatprep.subr.mxu0 0.0
        %v997 = vand.u32 %v330, 4294901760
        %998 = vmatpush1.msra.mxu0 %v997
        %999 = vmatprep.subr.mxu0 0.0
        %v1000 = vand.u32 %v329, 4294901760
        %1001 = vmatpush1.msra.mxu0 %v1000
        %1002 = vmatprep.subr.mxu0 0.0
        %v1003 = vand.u32 %v328, 4294901760
        %1004 = vmatpush1.msra.mxu0 %v1003
        %1005 = vmatprep.subr.mxu0 0.0
        %v1006 = vand.u32 %v327, 4294901760
        %1007 = vmatpush1.msra.mxu0 %v1006
        %1008 = vmatprep.subr.mxu0 0.0
        %v1009 = vand.u32 %v326, 4294901760
        %1010 = vmatpush1.msra.mxu0 %v1009
        %1011 = vmatprep.subr.mxu0 0.0
        %v1012 = vand.u32 %v325, 4294901760
        %1013 = vmatpush1.msra.mxu0 %v1012
        %1014 = vmatprep.subr.mxu0 0.0
        %v1015 = vand.u32 %v324, 4294901760
        %1016 = vmatpush1.msra.mxu0 %v1015
        %1017 = vmatprep.subr.mxu0 0.0
        %v1018 = vand.u32 %v323, 4294901760
        %1019 = vmatpush1.msra.mxu0 %v1018
        %1020 = vmatprep.subr.mxu0 0.0
        %v1021 = vand.u32 %v322, 4294901760
        %1022 = vmatpush1.msra.mxu0 %v1021
        %1023 = vmatprep.subr.mxu0 0.0
        %v1024 = vand.u32 %v321, 4294901760
        %1025 = vmatpush1.msra.mxu0 %v1024
        %1026 = vmatprep.subr.mxu0 0.0
        %1027 = vmatpush2.msra.mxu0 0.0
        %1028 = vmatprep.subr.mxu0 0.0
        %1029 = vmatpush2.msra.mxu0 0.0
        %1030 = vmatprep.subr.mxu0 0.0
        %1031 = vmatpush2.msra.mxu0 0.0
        %1032 = vmatprep.subr.mxu0 0.0
        %1033 = vmatpush2.msra.mxu0 0.0
        %1034 = vmatprep.subr.mxu0 0.0
        %1035 = vmatpush2.msra.mxu0 0.0
        %1036 = vmatprep.subr.mxu0 0.0
        %1037 = vmatpush2.msra.mxu0 0.0
        %1038 = vmatprep.subr.mxu0 0.0
        %1039 = vmatpush2.msra.mxu0 0.0
        %1040 = vmatprep.subr.mxu0 0.0
        %1041 = vmatpush2.msra.mxu0 0.0
        %1042 = vmatprep.subr.mxu0 0.0
        %1043 = vmatpush2.msra.mxu0 0.0
        %1044 = vmatprep.subr.mxu0 0.0
        %1045 = vmatpush2.msra.mxu0 0.0
        %1046 = vmatprep.subr.mxu0 0.0
        %1047 = vmatpush2.msra.mxu0 0.0
        %1048 = vmatprep.subr.mxu0 0.0
        %1049 = vmatpush2.msra.mxu0 0.0
        %1050 = vmatprep.subr.mxu0 0.0
        %1051 = vmatpush2.msra.mxu0 0.0
        %1052 = vmatprep.subr.mxu0 0.0
        %1053 = vmatpush2.msra.mxu0 0.0
        %1054 = vmatprep.subr.mxu0 0.0
        %1055 = vmatpush2.msra.mxu0 0.0
        %1056 = vmatprep.subr.mxu0 0.0
        %1057 = vmatpush2.msra.mxu0 0.0
        %1058 = vmatprep.mubr.f32.mxu0 0.0
        %v1059 = vand.u32 %v315, 4294901760
        %v1060 = vsub.f32 %v315, %v1059
        %v1061 = vand.u32 %v1060, 4294901760
        %v1062 = vsub.f32 %v1060, %v1061
        %v1063 = vand.u32 %v1062, 4294901760
        %1064 = vmatmul.mubr.f32.gmra.mxu0 %v1063
        %v1065 = vpop.f32.mrf.mxu0
        %v1066 = vadd.f32 %v963, %v1065
        %v1067 = vpop.f32.mrf.mxu0
        %1068 = vmatprep.mubr.f32.mxu0 0.0
        %v1069 = vand.u32 %v316, 4294901760
        %v1070 = vsub.f32 %v316, %v1069
        %v1071 = vand.u32 %v1070, 4294901760
        %v1072 = vsub.f32 %v1070, %v1071
        %v1073 = vand.u32 %v1072, 4294901760
        %1074 = vmatmul.mubr.f32.gmra.mxu0 %v1073
        %v1075 = vpop.f32.mrf.mxu0
        %v1076 = vadd.f32 %v969, %v1075
        %v1077 = vpop.f32.mrf.mxu0
        %1078 = vmatprep.mubr.f32.mxu0 0.0
        %v1079 = vand.u32 %v317, 4294901760
        %v1080 = vsub.f32 %v317, %v1079
        %v1081 = vand.u32 %v1080, 4294901760
        %v1082 = vsub.f32 %v1080, %v1081
        %v1083 = vand.u32 %v1082, 4294901760
        %1084 = vmatmul.mubr.f32.gmra.mxu0 %v1083
        %v1085 = vpop.f32.mrf.mxu0
        %v1086 = vadd.f32 %v975, %v1085
        %v1087 = vpop.f32.mrf.mxu0
        %1088 = vdwg.mxu0
        %1089 = vmatprep.subr.mxu0 0.0
        %v1090 = vand.u32 %v336, 4294901760
        %v1091 = vsub.f32 %v336, %v1090
        %v1092 = vand.u32 %v1091, 4294901760
        %v1093 = vsub.f32 %v1091, %v1092
        %v1094 = vand.u32 %v1093, 4294901760
        %1095 = vmatpush1.msra.mxu0 %v1094
        %1096 = vmatprep.subr.mxu0 0.0
        %v1097 = vand.u32 %v335, 4294901760
        %v1098 = vsub.f32 %v335, %v1097
        %v1099 = vand.u32 %v1098, 4294901760
        %v1100 = vsub.f32 %v1098, %v1099
        %v1101 = vand.u32 %v1100, 4294901760
        %1102 = vmatpush1.msra.mxu0 %v1101
        %1103 = vmatprep.subr.mxu0 0.0
        %v1104 = vand.u32 %v334, 4294901760
        %v1105 = vsub.f32 %v334, %v1104
        %v1106 = vand.u32 %v1105, 4294901760
        %v1107 = vsub.f32 %v1105, %v1106
        %v1108 = vand.u32 %v1107, 4294901760
        %1109 = vmatpush1.msra.mxu0 %v1108
        %1110 = vmatprep.subr.mxu0 0.0
        %v1111 = vand.u32 %v333, 4294901760
        %v1112 = vsub.f32 %v333, %v1111
        %v1113 = vand.u32 %v1112, 4294901760
        %v1114 = vsub.f32 %v1112, %v1113
        %v1115 = vand.u32 %v1114, 4294901760
        %1116 = vmatpush1.msra.mxu0 %v1115
        %1117 = vmatprep.subr.mxu0 0.0
        %v1118 = vand.u32 %v332, 4294901760
        %v1119 = vsub.f32 %v332, %v1118
        %v1120 = vand.u32 %v1119, 4294901760
        %v1121 = vsub.f32 %v1119, %v1120
        %v1122 = vand.u32 %v1121, 4294901760
        %1123 = vmatpush1.msra.mxu0 %v1122
        %1124 = vmatprep.subr.mxu0 0.0
        %v1125 = vand.u32 %v331, 4294901760
        %v1126 = vsub.f32 %v331, %v1125
        %v1127 = vand.u32 %v1126, 4294901760
        %v1128 = vsub.f32 %v1126, %v1127
        %v1129 = vand.u32 %v1128, 4294901760
        %1130 = vmatpush1.msra.mxu0 %v1129
        %1131 = vmatprep.subr.mxu0 0.0
        %v1132 = vand.u32 %v330, 4294901760
        %v1133 = vsub.f32 %v330, %v1132
        %v1134 = vand.u32 %v1133, 4294901760
        %v1135 = vsub.f32 %v1133, %v1134
        %v1136 = vand.u32 %v1135, 4294901760
        %1137 = vmatpush1.msra.mxu0 %v1136
        %1138 = vmatprep.subr.mxu0 0.0
        %v1139 = vand.u32 %v329, 4294901760
        %v1140 = vsub.f32 %v329, %v1139
        %v1141 = vand.u32 %v1140, 4294901760
        %v1142 = vsub.f32 %v1140, %v1141
        %v1143 = vand.u32 %v1142, 4294901760
        %1144 = vmatpush1.msra.mxu0 %v1143
        %1145 = vmatprep.subr.mxu0 0.0
        %v1146 = vand.u32 %v328, 4294901760
        %v1147 = vsub.f32 %v328, %v1146
        %v1148 = vand.u32 %v1147, 4294901760
        %v1149 = vsub.f32 %v1147, %v1148
        %v1150 = vand.u32 %v1149, 4294901760
        %1151 = vmatpush1.msra.mxu0 %v1150
        %1152 = vmatprep.subr.mxu0 0.0
        %v1153 = vand.u32 %v327, 4294901760
        %v1154 = vsub.f32 %v327, %v1153
        %v1155 = vand.u32 %v1154, 4294901760
        %v1156 = vsub.f32 %v1154, %v1155
        %v1157 = vand.u32 %v1156, 4294901760
        %1158 = vmatpush1.msra.mxu0 %v1157
        %1159 = vmatprep.subr.mxu0 0.0
        %v1160 = vand.u32 %v326, 4294901760
        %v1161 = vsub.f32 %v326, %v1160
        %v1162 = vand.u32 %v1161, 4294901760
        %v1163 = vsub.f32 %v1161, %v1162
        %v1164 = vand.u32 %v1163, 4294901760
        %1165 = vmatpush1.msra.mxu0 %v1164
        %1166 = vmatprep.subr.mxu0 0.0
        %v1167 = vand.u32 %v325, 4294901760
        %v1168 = vsub.f32 %v325, %v1167
        %v1169 = vand.u32 %v1168, 4294901760
        %v1170 = vsub.f32 %v1168, %v1169
        %v1171 = vand.u32 %v1170, 4294901760
        %1172 = vmatpush1.msra.mxu0 %v1171
        %1173 = vmatprep.subr.mxu0 0.0
        %v1174 = vand.u32 %v324, 4294901760
        %v1175 = vsub.f32 %v324, %v1174
        %v1176 = vand.u32 %v1175, 4294901760
        %v1177 = vsub.f32 %v1175, %v1176
        %v1178 = vand.u32 %v1177, 4294901760
        %1179 = vmatpush1.msra.mxu0 %v1178
        %1180 = vmatprep.subr.mxu0 0.0
        %v1181 = vand.u32 %v323, 4294901760
        %v1182 = vsub.f32 %v323, %v1181
        %v1183 = vand.u32 %v1182, 4294901760
        %v1184 = vsub.f32 %v1182, %v1183
        %v1185 = vand.u32 %v1184, 4294901760
        %1186 = vmatpush1.msra.mxu0 %v1185
        %1187 = vmatprep.subr.mxu0 0.0
        %v1188 = vand.u32 %v322, 4294901760
        %v1189 = vsub.f32 %v322, %v1188
        %v1190 = vand.u32 %v1189, 4294901760
        %v1191 = vsub.f32 %v1189, %v1190
        %v1192 = vand.u32 %v1191, 4294901760
        %1193 = vmatpush1.msra.mxu0 %v1192
        %1194 = vmatprep.subr.mxu0 0.0
        %v1195 = vand.u32 %v321, 4294901760
        %v1196 = vsub.f32 %v321, %v1195
        %v1197 = vand.u32 %v1196, 4294901760
        %v1198 = vsub.f32 %v1196, %v1197
        %v1199 = vand.u32 %v1198, 4294901760
        %1200 = vmatpush1.msra.mxu0 %v1199
        %1201 = vmatprep.subr.mxu0 0.0
        %1202 = vmatpush2.msra.mxu0 0.0
        %1203 = vmatprep.subr.mxu0 0.0
        %1204 = vmatpush2.msra.mxu0 0.0
        %1205 = vmatprep.subr.mxu0 0.0
        %1206 = vmatpush2.msra.mxu0 0.0
        %1207 = vmatprep.subr.mxu0 0.0
        %1208 = vmatpush2.msra.mxu0 0.0
        %1209 = vmatprep.subr.mxu0 0.0
        %1210 = vmatpush2.msra.mxu0 0.0
        %1211 = vmatprep.subr.mxu0 0.0
        %1212 = vmatpush2.msra.mxu0 0.0
        %1213 = vmatprep.subr.mxu0 0.0
        %1214 = vmatpush2.msra.mxu0 0.0
        %1215 = vmatprep.subr.mxu0 0.0
        %1216 = vmatpush2.msra.mxu0 0.0
        %1217 = vmatprep.subr.mxu0 0.0
        %1218 = vmatpush2.msra.mxu0 0.0
        %1219 = vmatprep.subr.mxu0 0.0
        %1220 = vmatpush2.msra.mxu0 0.0
        %1221 = vmatprep.subr.mxu0 0.0
        %1222 = vmatpush2.msra.mxu0 0.0
        %1223 = vmatprep.subr.mxu0 0.0
        %1224 = vmatpush2.msra.mxu0 0.0
        %1225 = vmatprep.subr.mxu0 0.0
        %1226 = vmatpush2.msra.mxu0 0.0
        %1227 = vmatprep.subr.mxu0 0.0
        %1228 = vmatpush2.msra.mxu0 0.0
        %1229 = vmatprep.subr.mxu0 0.0
        %1230 = vmatpush2.msra.mxu0 0.0
        %1231 = vmatprep.subr.mxu0 0.0
        %1232 = vmatpush2.msra.mxu0 0.0
        %1233 = vmatprep.mubr.f32.mxu0 0.0
        %v1234 = vand.u32 %v315, 4294901760
        %1235 = vmatmul.mubr.f32.gmra.mxu0 %v1234
        %v1236 = vpop.f32.mrf.mxu0
        %v1237 = vadd.f32 %v1066, %v1236
        %v1238 = vpop.f32.mrf.mxu0
        %1239 = vmatprep.mubr.f32.mxu0 0.0
        %v1240 = vand.u32 %v316, 4294901760
        %1241 = vmatmul.mubr.f32.gmra.mxu0 %v1240
        %v1242 = vpop.f32.mrf.mxu0
        %v1243 = vadd.f32 %v1076, %v1242
        %v1244 = vpop.f32.mrf.mxu0
        %1245 = vmatprep.mubr.f32.mxu0 0.0
        %v1246 = vand.u32 %v317, 4294901760
        %1247 = vmatmul.mubr.f32.gmra.mxu0 %v1246
        %v1248 = vpop.f32.mrf.mxu0
        %v1249 = vadd.f32 %v1086, %v1248
        %v1250 = vpop.f32.mrf.mxu0
        %1251 = vdwg.mxu0
        %1252 = vmatprep.subr.mxu0 0.0
        %v1253 = vand.u32 %v336, 4294901760
        %v1254 = vsub.f32 %v336, %v1253
        %1255 = vmatpush1.msra.mxu0 %v1254
        %1256 = vmatprep.subr.mxu0 0.0
        %v1257 = vand.u32 %v335, 4294901760
        %v1258 = vsub.f32 %v335, %v1257
        %1259 = vmatpush1.msra.mxu0 %v1258
        %1260 = vmatprep.subr.mxu0 0.0
        %v1261 = vand.u32 %v334, 4294901760
        %v1262 = vsub.f32 %v334, %v1261
        %1263 = vmatpush1.msra.mxu0 %v1262
        %1264 = vmatprep.subr.mxu0 0.0
        %v1265 = vand.u32 %v333, 4294901760
        %v1266 = vsub.f32 %v333, %v1265
        %1267 = vmatpush1.msra.mxu0 %v1266
        %1268 = vmatprep.subr.mxu0 0.0
        %v1269 = vand.u32 %v332, 4294901760
        %v1270 = vsub.f32 %v332, %v1269
        %1271 = vmatpush1.msra.mxu0 %v1270
        %1272 = vmatprep.subr.mxu0 0.0
        %v1273 = vand.u32 %v331, 4294901760
        %v1274 = vsub.f32 %v331, %v1273
        %1275 = vmatpush1.msra.mxu0 %v1274
        %1276 = vmatprep.subr.mxu0 0.0
        %v1277 = vand.u32 %v330, 4294901760
        %v1278 = vsub.f32 %v330, %v1277
        %1279 = vmatpush1.msra.mxu0 %v1278
        %1280 = vmatprep.subr.mxu0 0.0
        %v1281 = vand.u32 %v329, 4294901760
        %v1282 = vsub.f32 %v329, %v1281
        %1283 = vmatpush1.msra.mxu0 %v1282
        %1284 = vmatprep.subr.mxu0 0.0
        %v1285 = vand.u32 %v328, 4294901760
        %v1286 = vsub.f32 %v328, %v1285
        %1287 = vmatpush1.msra.mxu0 %v1286
        %1288 = vmatprep.subr.mxu0 0.0
        %v1289 = vand.u32 %v327, 4294901760
        %v1290 = vsub.f32 %v327, %v1289
        %1291 = vmatpush1.msra.mxu0 %v1290
        %1292 = vmatprep.subr.mxu0 0.0
        %v1293 = vand.u32 %v326, 4294901760
        %v1294 = vsub.f32 %v326, %v1293
        %1295 = vmatpush1.msra.mxu0 %v1294
        %1296 = vmatprep.subr.mxu0 0.0
        %v1297 = vand.u32 %v325, 4294901760
        %v1298 = vsub.f32 %v325, %v1297
        %1299 = vmatpush1.msra.mxu0 %v1298
        %1300 = vmatprep.subr.mxu0 0.0
        %v1301 = vand.u32 %v324, 4294901760
        %v1302 = vsub.f32 %v324, %v1301
        %1303 = vmatpush1.msra.mxu0 %v1302
        %1304 = vmatprep.subr.mxu0 0.0
        %v1305 = vand.u32 %v323, 4294901760
        %v1306 = vsub.f32 %v323, %v1305
        %1307 = vmatpush1.msra.mxu0 %v1306
        %1308 = vmatprep.subr.mxu0 0.0
        %v1309 = vand.u32 %v322, 4294901760
        %v1310 = vsub.f32 %v322, %v1309
        %1311 = vmatpush1.msra.mxu0 %v1310
        %1312 = vmatprep.subr.mxu0 0.0
        %v1313 = vand.u32 %v321, 4294901760
        %v1314 = vsub.f32 %v321, %v1313
        %1315 = vmatpush1.msra.mxu0 %v1314
        %1316 = vmatprep.subr.mxu0 0.0
        %1317 = vmatpush2.msra.mxu0 0.0
        %1318 = vmatprep.subr.mxu0 0.0
        %1319 = vmatpush2.msra.mxu0 0.0
        %1320 = vmatprep.subr.mxu0 0.0
        %1321 = vmatpush2.msra.mxu0 0.0
        %1322 = vmatprep.subr.mxu0 0.0
        %1323 = vmatpush2.msra.mxu0 0.0
        %1324 = vmatprep.subr.mxu0 0.0
        %1325 = vmatpush2.msra.mxu0 0.0
        %1326 = vmatprep.subr.mxu0 0.0
        %1327 = vmatpush2.msra.mxu0 0.0
        %1328 = vmatprep.subr.mxu0 0.0
        %1329 = vmatpush2.msra.mxu0 0.0
        %1330 = vmatprep.subr.mxu0 0.0
        %1331 = vmatpush2.msra.mxu0 0.0
        %1332 = vmatprep.subr.mxu0 0.0
        %1333 = vmatpush2.msra.mxu0 0.0
        %1334 = vmatprep.subr.mxu0 0.0
        %1335 = vmatpush2.msra.mxu0 0.0
        %1336 = vmatprep.subr.mxu0 0.0
        %1337 = vmatpush2.msra.mxu0 0.0
        %1338 = vmatprep.subr.mxu0 0.0
        %1339 = vmatpush2.msra.mxu0 0.0
        %1340 = vmatprep.subr.mxu0 0.0
        %1341 = vmatpush2.msra.mxu0 0.0
        %1342 = vmatprep.subr.mxu0 0.0
        %1343 = vmatpush2.msra.mxu0 0.0
        %1344 = vmatprep.subr.mxu0 0.0
        %1345 = vmatpush2.msra.mxu0 0.0
        %1346 = vmatprep.subr.mxu0 0.0
        %1347 = vmatpush2.msra.mxu0 0.0
        %1348 = vmatprep.mubr.f32.mxu0 0.0
        %v1349 = vand.u32 %v315, 4294901760
        %v1350 = vsub.f32 %v315, %v1349
        %1351 = vmatmul.mubr.f32.gmra.mxu0 %v1350
        %v1352 = vpop.f32.mrf.mxu0
        %v1353 = vadd.f32 %v1237, %v1352
        %v1354 = vpop.f32.mrf.mxu0
        %1355 = vmatprep.mubr.f32.mxu0 0.0
        %v1356 = vand.u32 %v316, 4294901760
        %v1357 = vsub.f32 %v316, %v1356
        %1358 = vmatmul.mubr.f32.gmra.mxu0 %v1357
        %v1359 = vpop.f32.mrf.mxu0
        %v1360 = vadd.f32 %v1243, %v1359
        %v1361 = vpop.f32.mrf.mxu0
        %1362 = vmatprep.mubr.f32.mxu0 0.0
        %v1363 = vand.u32 %v317, 4294901760
        %v1364 = vsub.f32 %v317, %v1363
        %1365 = vmatmul.mubr.f32.gmra.mxu0 %v1364
        %v1366 = vpop.f32.mrf.mxu0
        %v1367 = vadd.f32 %v1249, %v1366
        %v1368 = vpop.f32.mrf.mxu0
        %1369 = vdwg.mxu0
        %1370 = vmatprep.subr.mxu0 0.0
        %v1371 = vand.u32 %v336, 4294901760
        %1372 = vmatpush1.msra.mxu0 %v1371
        %1373 = vmatprep.subr.mxu0 0.0
        %v1374 = vand.u32 %v335, 4294901760
        %1375 = vmatpush1.msra.mxu0 %v1374
        %1376 = vmatprep.subr.mxu0 0.0
        %v1377 = vand.u32 %v334, 4294901760
        %1378 = vmatpush1.msra.mxu0 %v1377
        %1379 = vmatprep.subr.mxu0 0.0
        %v1380 = vand.u32 %v333, 4294901760
        %1381 = vmatpush1.msra.mxu0 %v1380
        %1382 = vmatprep.subr.mxu0 0.0
        %v1383 = vand.u32 %v332, 4294901760
        %1384 = vmatpush1.msra.mxu0 %v1383
        %1385 = vmatprep.subr.mxu0 0.0
        %v1386 = vand.u32 %v331, 4294901760
        %1387 = vmatpush1.msra.mxu0 %v1386
        %1388 = vmatprep.subr.mxu0 0.0
        %v1389 = vand.u32 %v330, 4294901760
        %1390 = vmatpush1.msra.mxu0 %v1389
        %1391 = vmatprep.subr.mxu0 0.0
        %v1392 = vand.u32 %v329, 4294901760
        %1393 = vmatpush1.msra.mxu0 %v1392
        %1394 = vmatprep.subr.mxu0 0.0
        %v1395 = vand.u32 %v328, 4294901760
        %1396 = vmatpush1.msra.mxu0 %v1395
        %1397 = vmatprep.subr.mxu0 0.0
        %v1398 = vand.u32 %v327, 4294901760
        %1399 = vmatpush1.msra.mxu0 %v1398
        %1400 = vmatprep.subr.mxu0 0.0
        %v1401 = vand.u32 %v326, 4294901760
        %1402 = vmatpush1.msra.mxu0 %v1401
        %1403 = vmatprep.subr.mxu0 0.0
        %v1404 = vand.u32 %v325, 4294901760
        %1405 = vmatpush1.msra.mxu0 %v1404
        %1406 = vmatprep.subr.mxu0 0.0
        %v1407 = vand.u32 %v324, 4294901760
        %1408 = vmatpush1.msra.mxu0 %v1407
        %1409 = vmatprep.subr.mxu0 0.0
        %v1410 = vand.u32 %v323, 4294901760
        %1411 = vmatpush1.msra.mxu0 %v1410
        %1412 = vmatprep.subr.mxu0 0.0
        %v1413 = vand.u32 %v322, 4294901760
        %1414 = vmatpush1.msra.mxu0 %v1413
        %1415 = vmatprep.subr.mxu0 0.0
        %v1416 = vand.u32 %v321, 4294901760
        %1417 = vmatpush1.msra.mxu0 %v1416
        %1418 = vmatprep.subr.mxu0 0.0
        %1419 = vmatpush2.msra.mxu0 0.0
        %1420 = vmatprep.subr.mxu0 0.0
        %1421 = vmatpush2.msra.mxu0 0.0
        %1422 = vmatprep.subr.mxu0 0.0
        %1423 = vmatpush2.msra.mxu0 0.0
        %1424 = vmatprep.subr.mxu0 0.0
        %1425 = vmatpush2.msra.mxu0 0.0
        %1426 = vmatprep.subr.mxu0 0.0
        %1427 = vmatpush2.msra.mxu0 0.0
        %1428 = vmatprep.subr.mxu0 0.0
        %1429 = vmatpush2.msra.mxu0 0.0
        %1430 = vmatprep.subr.mxu0 0.0
        %1431 = vmatpush2.msra.mxu0 0.0
        %1432 = vmatprep.subr.mxu0 0.0
        %1433 = vmatpush2.msra.mxu0 0.0
        %1434 = vmatprep.subr.mxu0 0.0
        %1435 = vmatpush2.msra.mxu0 0.0
        %1436 = vmatprep.subr.mxu0 0.0
        %1437 = vmatpush2.msra.mxu0 0.0
        %1438 = vmatprep.subr.mxu0 0.0
        %1439 = vmatpush2.msra.mxu0 0.0
        %1440 = vmatprep.subr.mxu0 0.0
        %1441 = vmatpush2.msra.mxu0 0.0
        %1442 = vmatprep.subr.mxu0 0.0
        %1443 = vmatpush2.msra.mxu0 0.0
        %1444 = vmatprep.subr.mxu0 0.0
        %1445 = vmatpush2.msra.mxu0 0.0
        %1446 = vmatprep.subr.mxu0 0.0
        %1447 = vmatpush2.msra.mxu0 0.0
        %1448 = vmatprep.subr.mxu0 0.0
        %1449 = vmatpush2.msra.mxu0 0.0
        %1450 = vmatprep.mubr.f32.mxu0 0.0
        %v1451 = vand.u32 %v315, 4294901760
        %v1452 = vsub.f32 %v315, %v1451
        %v1453 = vand.u32 %v1452, 4294901760
        %1454 = vmatmul.mubr.f32.gmra.mxu0 %v1453
        %v1455 = vpop.f32.mrf.mxu0
        %v1456 = vadd.f32 %v1353, %v1455
        %v1457 = vpop.f32.mrf.mxu0
        %1458 = vmatprep.mubr.f32.mxu0 0.0
        %v1459 = vand.u32 %v316, 4294901760
        %v1460 = vsub.f32 %v316, %v1459
        %v1461 = vand.u32 %v1460, 4294901760
        %1462 = vmatmul.mubr.f32.gmra.mxu0 %v1461
        %v1463 = vpop.f32.mrf.mxu0
        %v1464 = vadd.f32 %v1360, %v1463
        %v1465 = vpop.f32.mrf.mxu0
        %1466 = vmatprep.mubr.f32.mxu0 0.0
        %v1467 = vand.u32 %v317, 4294901760
        %v1468 = vsub.f32 %v317, %v1467
        %v1469 = vand.u32 %v1468, 4294901760
        %1470 = vmatmul.mubr.f32.gmra.mxu0 %v1469
        %v1471 = vpop.f32.mrf.mxu0
        %v1472 = vadd.f32 %v1367, %v1471
        %v1473 = vpop.f32.mrf.mxu0
        %1474 = vdwg.mxu0
        %1475 = vmatprep.subr.mxu0 0.0
        %v1476 = vand.u32 %v336, 4294901760
        %v1477 = vsub.f32 %v336, %v1476
        %v1478 = vand.u32 %v1477, 4294901760
        %1479 = vmatpush1.msra.mxu0 %v1478
        %1480 = vmatprep.subr.mxu0 0.0
        %v1481 = vand.u32 %v335, 4294901760
        %v1482 = vsub.f32 %v335, %v1481
        %v1483 = vand.u32 %v1482, 4294901760
        %1484 = vmatpush1.msra.mxu0 %v1483
        %1485 = vmatprep.subr.mxu0 0.0
        %v1486 = vand.u32 %v334, 4294901760
        %v1487 = vsub.f32 %v334, %v1486
        %v1488 = vand.u32 %v1487, 4294901760
        %1489 = vmatpush1.msra.mxu0 %v1488
        %1490 = vmatprep.subr.mxu0 0.0
        %v1491 = vand.u32 %v333, 4294901760
        %v1492 = vsub.f32 %v333, %v1491
        %v1493 = vand.u32 %v1492, 4294901760
        %1494 = vmatpush1.msra.mxu0 %v1493
        %1495 = vmatprep.subr.mxu0 0.0
        %v1496 = vand.u32 %v332, 4294901760
        %v1497 = vsub.f32 %v332, %v1496
        %v1498 = vand.u32 %v1497, 4294901760
        %1499 = vmatpush1.msra.mxu0 %v1498
        %1500 = vmatprep.subr.mxu0 0.0
        %v1501 = vand.u32 %v331, 4294901760
        %v1502 = vsub.f32 %v331, %v1501
        %v1503 = vand.u32 %v1502, 4294901760
        %1504 = vmatpush1.msra.mxu0 %v1503
        %1505 = vmatprep.subr.mxu0 0.0
        %v1506 = vand.u32 %v330, 4294901760
        %v1507 = vsub.f32 %v330, %v1506
        %v1508 = vand.u32 %v1507, 4294901760
        %1509 = vmatpush1.msra.mxu0 %v1508
        %1510 = vmatprep.subr.mxu0 0.0
        %v1511 = vand.u32 %v329, 4294901760
        %v1512 = vsub.f32 %v329, %v1511
        %v1513 = vand.u32 %v1512, 4294901760
        %1514 = vmatpush1.msra.mxu0 %v1513
        %1515 = vmatprep.subr.mxu0 0.0
        %v1516 = vand.u32 %v328, 4294901760
        %v1517 = vsub.f32 %v328, %v1516
        %v1518 = vand.u32 %v1517, 4294901760
        %1519 = vmatpush1.msra.mxu0 %v1518
        %1520 = vmatprep.subr.mxu0 0.0
        %v1521 = vand.u32 %v327, 4294901760
        %v1522 = vsub.f32 %v327, %v1521
        %v1523 = vand.u32 %v1522, 4294901760
        %1524 = vmatpush1.msra.mxu0 %v1523
        %1525 = vmatprep.subr.mxu0 0.0
        %v1526 = vand.u32 %v326, 4294901760
        %v1527 = vsub.f32 %v326, %v1526
        %v1528 = vand.u32 %v1527, 4294901760
        %1529 = vmatpush1.msra.mxu0 %v1528
        %1530 = vmatprep.subr.mxu0 0.0
        %v1531 = vand.u32 %v325, 4294901760
        %v1532 = vsub.f32 %v325, %v1531
        %v1533 = vand.u32 %v1532, 4294901760
        %1534 = vmatpush1.msra.mxu0 %v1533
        %1535 = vmatprep.subr.mxu0 0.0
        %v1536 = vand.u32 %v324, 4294901760
        %v1537 = vsub.f32 %v324, %v1536
        %v1538 = vand.u32 %v1537, 4294901760
        %1539 = vmatpush1.msra.mxu0 %v1538
        %1540 = vmatprep.subr.mxu0 0.0
        %v1541 = vand.u32 %v323, 4294901760
        %v1542 = vsub.f32 %v323, %v1541
        %v1543 = vand.u32 %v1542, 4294901760
        %1544 = vmatpush1.msra.mxu0 %v1543
        %1545 = vmatprep.subr.mxu0 0.0
        %v1546 = vand.u32 %v322, 4294901760
        %v1547 = vsub.f32 %v322, %v1546
        %v1548 = vand.u32 %v1547, 4294901760
        %1549 = vmatpush1.msra.mxu0 %v1548
        %1550 = vmatprep.subr.mxu0 0.0
        %v1551 = vand.u32 %v321, 4294901760
        %v1552 = vsub.f32 %v321, %v1551
        %v1553 = vand.u32 %v1552, 4294901760
        %1554 = vmatpush1.msra.mxu0 %v1553
        %1555 = vmatprep.subr.mxu0 0.0
        %1556 = vmatpush2.msra.mxu0 0.0
        %1557 = vmatprep.subr.mxu0 0.0
        %1558 = vmatpush2.msra.mxu0 0.0
        %1559 = vmatprep.subr.mxu0 0.0
        %1560 = vmatpush2.msra.mxu0 0.0
        %1561 = vmatprep.subr.mxu0 0.0
        %1562 = vmatpush2.msra.mxu0 0.0
        %1563 = vmatprep.subr.mxu0 0.0
        %1564 = vmatpush2.msra.mxu0 0.0
        %1565 = vmatprep.subr.mxu0 0.0
        %1566 = vmatpush2.msra.mxu0 0.0
        %1567 = vmatprep.subr.mxu0 0.0
        %1568 = vmatpush2.msra.mxu0 0.0
        %1569 = vmatprep.subr.mxu0 0.0
        %1570 = vmatpush2.msra.mxu0 0.0
        %1571 = vmatprep.subr.mxu0 0.0
        %1572 = vmatpush2.msra.mxu0 0.0
        %1573 = vmatprep.subr.mxu0 0.0
        %1574 = vmatpush2.msra.mxu0 0.0
        %1575 = vmatprep.subr.mxu0 0.0
        %1576 = vmatpush2.msra.mxu0 0.0
        %1577 = vmatprep.subr.mxu0 0.0
        %1578 = vmatpush2.msra.mxu0 0.0
        %1579 = vmatprep.subr.mxu0 0.0
        %1580 = vmatpush2.msra.mxu0 0.0
        %1581 = vmatprep.subr.mxu0 0.0
        %1582 = vmatpush2.msra.mxu0 0.0
        %1583 = vmatprep.subr.mxu0 0.0
        %1584 = vmatpush2.msra.mxu0 0.0
        %1585 = vmatprep.subr.mxu0 0.0
        %1586 = vmatpush2.msra.mxu0 0.0
        %1587 = vmatprep.mubr.f32.mxu0 0.0
        %v1588 = vand.u32 %v315, 4294901760
        %1589 = vmatmul.mubr.f32.gmra.mxu0 %v1588
        %v1590 = vpop.f32.mrf.mxu0
        %v1591 = vadd.f32 %v1456, %v1590
        %v1592 = vpop.f32.mrf.mxu0
        %1593 = vmatprep.mubr.f32.mxu0 0.0
        %v1594 = vand.u32 %v316, 4294901760
        %1595 = vmatmul.mubr.f32.gmra.mxu0 %v1594
        %v1596 = vpop.f32.mrf.mxu0
        %v1597 = vadd.f32 %v1464, %v1596
        %v1598 = vpop.f32.mrf.mxu0
        %1599 = vmatprep.mubr.f32.mxu0 0.0
        %v1600 = vand.u32 %v317, 4294901760
        %1601 = vmatmul.mubr.f32.gmra.mxu0 %v1600
        %v1602 = vpop.f32.mrf.mxu0
        %v1603 = vadd.f32 %v1472, %v1602
        %v1604 = vpop.f32.mrf.mxu0
        %1605 = vdwg.mxu0
        %1606 = vmatprep.subr.mxu0 0.0
        %v1607 = vand.u32 %v336, 4294901760
        %1608 = vmatpush1.msra.mxu0 %v1607
        %1609 = vmatprep.subr.mxu0 0.0
        %v1610 = vand.u32 %v335, 4294901760
        %1611 = vmatpush1.msra.mxu0 %v1610
        %1612 = vmatprep.subr.mxu0 0.0
        %v1613 = vand.u32 %v334, 4294901760
        %1614 = vmatpush1.msra.mxu0 %v1613
        %1615 = vmatprep.subr.mxu0 0.0
        %v1616 = vand.u32 %v333, 4294901760
        %1617 = vmatpush1.msra.mxu0 %v1616
        %1618 = vmatprep.subr.mxu0 0.0
        %v1619 = vand.u32 %v332, 4294901760
        %1620 = vmatpush1.msra.mxu0 %v1619
        %1621 = vmatprep.subr.mxu0 0.0
        %v1622 = vand.u32 %v331, 4294901760
        %1623 = vmatpush1.msra.mxu0 %v1622
        %1624 = vmatprep.subr.mxu0 0.0
        %v1625 = vand.u32 %v330, 4294901760
        %1626 = vmatpush1.msra.mxu0 %v1625
        %1627 = vmatprep.subr.mxu0 0.0
        %v1628 = vand.u32 %v329, 4294901760
        %1629 = vmatpush1.msra.mxu0 %v1628
        %1630 = vmatprep.subr.mxu0 0.0
        %v1631 = vand.u32 %v328, 4294901760
        %1632 = vmatpush1.msra.mxu0 %v1631
        %1633 = vmatprep.subr.mxu0 0.0
        %v1634 = vand.u32 %v327, 4294901760
        %1635 = vmatpush1.msra.mxu0 %v1634
        %1636 = vmatprep.subr.mxu0 0.0
        %v1637 = vand.u32 %v326, 4294901760
        %1638 = vmatpush1.msra.mxu0 %v1637
        %1639 = vmatprep.subr.mxu0 0.0
        %v1640 = vand.u32 %v325, 4294901760
        %1641 = vmatpush1.msra.mxu0 %v1640
        %1642 = vmatprep.subr.mxu0 0.0
        %v1643 = vand.u32 %v324, 4294901760
        %1644 = vmatpush1.msra.mxu0 %v1643
        %1645 = vmatprep.subr.mxu0 0.0
        %v1646 = vand.u32 %v323, 4294901760
        %1647 = vmatpush1.msra.mxu0 %v1646
        %1648 = vmatprep.subr.mxu0 0.0
        %v1649 = vand.u32 %v322, 4294901760
        %1650 = vmatpush1.msra.mxu0 %v1649
        %1651 = vmatprep.subr.mxu0 0.0
        %v1652 = vand.u32 %v321, 4294901760
        %1653 = vmatpush1.msra.mxu0 %v1652
        %1654 = vmatprep.subr.mxu0 0.0
        %1655 = vmatpush2.msra.mxu0 0.0
        %1656 = vmatprep.subr.mxu0 0.0
        %1657 = vmatpush2.msra.mxu0 0.0
        %1658 = vmatprep.subr.mxu0 0.0
        %1659 = vmatpush2.msra.mxu0 0.0
        %1660 = vmatprep.subr.mxu0 0.0
        %1661 = vmatpush2.msra.mxu0 0.0
        %1662 = vmatprep.subr.mxu0 0.0
        %1663 = vmatpush2.msra.mxu0 0.0
        %1664 = vmatprep.subr.mxu0 0.0
        %1665 = vmatpush2.msra.mxu0 0.0
        %1666 = vmatprep.subr.mxu0 0.0
        %1667 = vmatpush2.msra.mxu0 0.0
        %1668 = vmatprep.subr.mxu0 0.0
        %1669 = vmatpush2.msra.mxu0 0.0
        %1670 = vmatprep.subr.mxu0 0.0
        %1671 = vmatpush2.msra.mxu0 0.0
        %1672 = vmatprep.subr.mxu0 0.0
        %1673 = vmatpush2.msra.mxu0 0.0
        %1674 = vmatprep.subr.mxu0 0.0
        %1675 = vmatpush2.msra.mxu0 0.0
        %1676 = vmatprep.subr.mxu0 0.0
        %1677 = vmatpush2.msra.mxu0 0.0
        %1678 = vmatprep.subr.mxu0 0.0
        %1679 = vmatpush2.msra.mxu0 0.0
        %1680 = vmatprep.subr.mxu0 0.0
        %1681 = vmatpush2.msra.mxu0 0.0
        %1682 = vmatprep.subr.mxu0 0.0
        %1683 = vmatpush2.msra.mxu0 0.0
        %1684 = vmatprep.subr.mxu0 0.0
        %1685 = vmatpush2.msra.mxu0 0.0
        %1686 = vmatprep.mubr.f32.mxu0 0.0
        %v1687 = vand.u32 %v315, 4294901760
        %1688 = vmatmul.mubr.f32.gmra.mxu0 %v1687
        %v1689 = vpop.f32.mrf.mxu0
        %v1690 = vadd.f32 %v1591, %v1689
        %v1691 = vpop.f32.mrf.mxu0
        %1692 = vmatprep.mubr.f32.mxu0 0.0
        %v1693 = vand.u32 %v316, 4294901760
        %1694 = vmatmul.mubr.f32.gmra.mxu0 %v1693
        %v1695 = vpop.f32.mrf.mxu0
        %v1696 = vadd.f32 %v1597, %v1695
        %v1697 = vpop.f32.mrf.mxu0
        %1698 = vmatprep.mubr.f32.mxu0 0.0
        %v1699 = vand.u32 %v317, 4294901760
        %1700 = vmatmul.mubr.f32.gmra.mxu0 %v1699
        %v1701 = vpop.f32.mrf.mxu0
        %v1702 = vadd.f32 %v1603, %v1701
        %v1703 = vpop.f32.mrf.mxu0
        %1704 = vdwg.mxu0
        %v1705 = vld [vmem:[%s4] sm:$0x1]
        %v1707 = vlaneseq
        %v1708 = vshrl.u32 %v1707, 7
        %v1709 = vsub.s32 0, %v1708
        %v1710 = vrot.slane %v1705, %v1709
        %v1712 = vadd.f32 %v1690, %v1710
        %v1713 = vadd.f32 %v1696, %v1710
        %v1714 = vadd.f32 %v1702, %v1710
        %1715 = vst [vmem:[%s311] sm:$0xff] %v1712
        %1716 = vst [vmem:[%s311 + $0x8] sm:$0xff] %v1713
        %1717 = vst [vmem:[%s311 + $0x10] sm:$0xff] %v1714
        %s1718 = sand.u32 %s149, 1
        %s1719 = scalar_lea.sflag [#allocation4], %s1718
        %s1720 = sand.u32 %s149, 1
        %s1721 = smul.addr %s1720, 24
        %s1722 = scalar_lea.vmem [#allocation10], %s1721
        // Predicated region
        $region57: #{tpu_custom_call.1} parent=39 // pred_check
          %p1723 = pneg %p159
        $region58: #{tpu_custom_call.1} parent=39 // pred_check_branch
          %1725 = sbr.rel (%p1723) target = $region60
        $region59: #{tpu_custom_call.1} parent=39 // pred_region
          %s1726 = smul.u32 3, %s26
          %s1728 = ssub.s32 384, 384
          %1729 = vsyncadd %s1719, %s1728
          %s1730 = smul.addr %s1726, 128
          %s1731 = scalar_lea.hbm %s5, %s1730
          %s1732 = sshll.u32 %s1722, 4
          %s1733 = int_to_ptr.vmem [resolvable:$true] %s1732
          %1738 = dma.vmem_to_hbm [thread:$0]  %s1733, 384, %s1731, %s1719, 128, 128, 8
        $region60: #{tpu_custom_call.1} parent=39 // pred_fallthru
          _
      $region40: #{tpu_custom_call.1} parent=5 // pred_fallthru
        _
      %p1739 = scmp.le.s32.totalorder 2, %s21
      // Predicated region
      $region61: #{tpu_custom_call.1} parent=5 // pred_check
        %p1740 = pneg %p1739
      $region62: #{tpu_custom_call.1} parent=5 // pred_check_branch
        %1742 = sbr.rel (%p1740) target = $region64
      $region63: #{tpu_custom_call.1} parent=5 // pred_region
        %s1743 = ssub.s32 %s21, 2
        // Predicated region
        $region65: #{tpu_custom_call.1} parent=63 // pred_check
          %p1744 = pneg %p165
        $region66: #{tpu_custom_call.1} parent=63 // pred_check_branch
          %1746 = sbr.rel (%p1744) target = $region68
        $region67: #{tpu_custom_call.1} parent=63 // pred_region
          %s1747 = sand.u32 %s150, 1
          %s1748 = scalar_lea.sflag [#allocation4], %s1747
          %s1749 = sand.u32 %s150, 1
          %s1750 = smul.addr %s1749, 24
          %s1751 = scalar_lea.vmem [#allocation10], %s1750
          %1752 = dma.done %s1748, 384
        $region68: #{tpu_custom_call.1} parent=63 // pred_fallthru
          _
      $region64: #{tpu_custom_call.1} parent=5 // pred_fallthru
        _
    $region6: #{tpu_custom_call.1} parent=1 // loop_footer
      %s25 = sadd.s32 1, %s21
    $region7: #{tpu_custom_call.1} parent=1 // loop_footer_branch
      %20 = sbr.rel target = $region3
    $region8: #{tpu_custom_call.1} parent=1 // loop_exit
      _
    %1753 = vsyncpa [#allocation3], 1
    %s1754 = scalar_lea.sflag [#allocation3], 1
    %1755 = vsyncpa %s1754, 1
    %1756 = vsyncpa [#allocation6], 1
    %s1757 = scalar_lea.sflag [#allocation6], 1
    %1758 = vsyncpa %s1757, 1
    %1759 = vsyncpa [#allocation9], 1
    %1760 = vsyncpa [#allocation4], 1
    %s1761 = scalar_lea.sflag [#allocation4], 1
    %1762 = vsyncpa %s1761, 1

</llo_original>
